<compile_context>
chip_gen: v7x
topology: tpu7x:2x2x1
jax: 0.10.0
libtpu: 0.0.40
codegen_flags: <defaults>
</compile_context>

<pallas_src>
import jax
import jax.numpy as jnp
from jax.experimental import pallas as pl
from jax.experimental.pallas import tpu as pltpu

EPS = 1e-6
NUM_GROUPS = 32


def _vmem_estimate(C, S, TQ, SC, x_bufs):
    """Rough upper bound on resident + transient VMEM bytes for one kernel."""
    weights = (C * C * 4            # gmat (f32)
               + C * 3 * 4          # gamma|beta|bl
               + 3 * C * 4          # bq|bk|bv column
               + 3 * C * C * 2      # fused wqkv (bf16)
               + C * C * 2)         # wl (bf16)
    resident = (x_bufs * C * S * 4      # full-S x block (1 or 2 buffers)
                + 2 * C * TQ * 4        # residual tile (double-buffered)
                + 2 * C * TQ * 4        # output tile (double-buffered)
                + 3 * C * S * 2         # q/k/v bf16 scratch
                + 2 * weights)          # constant inputs (double-buffered)
    transients = (2 * TQ * S * 4        # scores + exp(scores), f32
                  + 2 * TQ * C * 4      # attn f32 (+ normalized copy)
                  + C * TQ * 4          # projected out f32
                  + 3 * C * SC * 4      # fused QKV chunk, f32
                  + C * SC * 6)         # x chunk (f32) + h chunk (bf16)
    return resident + transients


def _choose_tiles(C, S, vmem_limit):
    """Pick (query tile TQ, projection chunk SC, x buffer count) to fit VMEM."""
    tq_cands = [t for t in (256, 128) if S % t == 0 and S // t >= 2] or [S]
    sc_cands = [t for t in (1024, 512, 256, 128) if S % t == 0] or [S]
    budget = int(vmem_limit * 0.9)          # headroom for compiler-internal scratch
    for x_bufs in (2, 1):                   # prefer default double-buffering
        for tq in tq_cands:
            for sc in sc_cands:
                if _vmem_estimate(C, S, tq, sc, x_bufs) <= budget:
                    return tq, sc, x_bufs
    return tq_cands[-1], sc_cands[-1], 1    # smallest config; let Mosaic decide


def attn_block_pallas(x_nchw, params):
    """x_nchw: [B, C, H, W] float32.  Returns [B, C, H, W]."""
    B, C, H, W = x_nchw.shape
    S = H * W
    assert C % NUM_GROUPS == 0
    cpg = C // NUM_GROUPS
    scale = float(C) ** -0.5

    # NCHW is already [B, C, H*W] in memory -> free reshape, no HBM transpose.
    x_bcs = x_nchw.reshape(B, C, S)

    # Group-averaging matrix [C, C]: gmat[i, j] = 1/(cpg*S) if same group.
    gidx = jnp.arange(C) // cpg
    gmat = (gidx[:, None] == gidx[None, :]).astype(jnp.float32) / float(cpg * S)

    # Fused QKV weight [3C, C] / bias [3C, 1]; the attention scale is folded
    # into the q projection so no per-tile scale multiply is needed.
    wq = params["wq"][:, :, 0, 0] * scale
    wk = params["wk"][:, :, 0, 0]
    wv = params["wv"][:, :, 0, 0]
    wqkv = jnp.concatenate([wq, wk, wv], axis=0).astype(jnp.bfloat16)      # [3C, C]
    wl_bf = params["wl"][:, :, 0, 0].astype(jnp.bfloat16)                  # [C, C]
    bqkv = jnp.concatenate([params["bq"] * scale, params["bk"], params["bv"]]
                           ).reshape(3 * C, 1).astype(jnp.float32)         # [3C, 1]
    # Packed per-channel constants: col0=gamma, col1=beta, col2=bl.
    consts = jnp.stack([params["gn_w"], params["gn_b"], params["bl"]],
                       axis=1).astype(jnp.float32)                         # [C, 3]

    # ---- VMEM budget (v7x: 64 MiB physical; v5e/v6e: 128 MiB) ----
    try:
        vmem_cap = int(pltpu.get_tpu_info().vmem_capacity_bytes)
    except Exception:
        vmem_cap = 64 * 1024 * 1024          # conservative fallback
    vmem_limit = min(vmem_cap - (8 << 20), 112 << 20)

    TQ, SC, x_bufs = _choose_tiles(C, S, vmem_limit)
    nq = S // TQ
    n_sc = S // SC

    def kernel(xfull_ref, xres_ref, gmat_ref, consts_ref, bqkv_ref, wqkv_ref,
               wl_ref, o_ref, q_s, k_s, v_s, stat_s):
        qi = pl.program_id(1)
        cst = consts_ref[...]                          # [C, 3]: gamma | beta | bl

        # ---- once per batch: GroupNorm stats + fused QKV into bf16 scratch ----
        @pl.when(qi == 0)
        def _precompute():
            # Pass 1: per-channel sum / sum-of-squares, chunked over S so the
            # elementwise transient stays [C, SC].
            stat_s[...] = jnp.zeros_like(stat_s)

            def _stats(sc, carry):
                lo = pl.multiple_of(sc * SC, SC)
                xc = xfull_ref[0, :, pl.ds(lo, SC)]                  # [C, SC] f32
                s1 = jnp.sum(xc, axis=1, keepdims=True)
                s2 = jnp.sum(xc * xc, axis=1, keepdims=True)
                stat_s[...] += jnp.concatenate([s1, s2], axis=1)
                return carry
            jax.lax.fori_loop(0, n_sc, _stats, 0)

            # Group averaging via one tiny [C,C]x[C,2] matmul.
            # E[x^2]-E[x]^2 with a clamp; activations are ~zero-mean so f32
            # cancellation is benign here (flagged in review).
            gstats = jnp.dot(gmat_ref[...], stat_s[...],
                             preferred_element_type=jnp.float32)     # [C, 2]
            mean = gstats[:, 0:1]
            var = jnp.maximum(gstats[:, 1:2] - mean * mean, 0.0)
            inv = jax.lax.rsqrt(var + EPS)
            ga = inv * cst[:, 0:1]                     # per-channel scale
            gb = cst[:, 1:2] - mean * ga               # per-channel shift

            # Pass 2: fused GroupNorm-apply + QKV projection, chunked over S.
            # One [3C,SC] f32 transient at a time (fori_loop bounds live ranges).
            def _qkv(sc, carry):
                lo = pl.multiple_of(sc * SC, SC)
                xc = xfull_ref[0, :, pl.ds(lo, SC)]                  # [C, SC] f32
                h_bf = (xc * ga + gb).astype(jnp.bfloat16)           # GN fused here
                qkv = jnp.dot(wqkv_ref[...], h_bf,
                              preferred_element_type=jnp.float32) + bqkv_ref[...]
                q_s[:, pl.ds(lo, SC)] = qkv[0:C].astype(jnp.bfloat16)
                k_s[:, pl.ds(lo, SC)] = qkv[C:2 * C].astype(jnp.bfloat16)
                v_s[:, pl.ds(lo, SC)] = qkv[2 * C:].astype(jnp.bfloat16)
                return carry
            jax.lax.fori_loop(0, n_sc, _qkv, 0)

        # ---- per query tile: attention + output projection + residual ----
        t0 = pl.multiple_of(qi * TQ, TQ)
        # Only remaining transpose: a bf16 [C,TQ]->[TQ,C] tile (overlaps MXU).
        q_tile = jnp.transpose(q_s[:, pl.ds(t0, TQ)])                # [TQ, C] bf16
        scores = jnp.dot(q_tile, k_s[...],
                         preferred_element_type=jnp.float32)         # [TQ, S]
        m = jnp.max(scores, axis=-1, keepdims=True)
        p = jnp.exp(scores - m)                                      # f32 (v5e-safe)
        rs = jnp.sum(p, axis=-1, keepdims=True)                      # [TQ, 1]
        # P @ V^T via transposed-RHS dot_general: no XLU transpose of V needed.
        attn = jax.lax.dot_general(
            p.astype(jnp.bfloat16), v_s[...],
            dimension_numbers=(((1,), (1,)), ((), ())),
            preferred_element_type=jnp.float32)                      # [TQ, C]
        # Deferred softmax normalization on the small [TQ,C] tile (EUP recip).
        attn = attn * pl.reciprocal(rs, approx=True)
        # Output projection wl @ attn^T via transposed-RHS dot -> [C, TQ].
        out = jax.lax.dot_general(
            wl_ref[...], attn.astype(jnp.bfloat16),
            dimension_numbers=(((1,), (1,)), ((), ())),
            preferred_element_type=jnp.float32) + cst[:, 2:3]        # + bl
        o_ref[0] = (xres_ref[0] + out).astype(o_ref.dtype)

    def _xfull_spec():
        idx = lambda b, q: (b, 0, 0)
        if x_bufs == 1:
            # Block index only changes at batch boundaries; single-buffer it to
            # reclaim C*S*4 bytes (needed for v7x 64 MiB at production shapes).
            try:
                return pl.BlockSpec((1, C, S), idx, pipeline_mode=pl.Buffered(1))
            except Exception:
                pass  # older jax without pipeline_mode: keep default buffering
        return pl.BlockSpec((1, C, S), idx)

    grid_spec = pltpu.PrefetchScalarGridSpec(
        num_scalar_prefetch=0,
        grid=(B, nq),
        in_specs=[
            _xfull_spec(),                                        # x, full S (precompute)
            pl.BlockSpec((1, C, TQ), lambda b, q: (b, 0, q)),     # x, residual tile
            pl.BlockSpec((C, C), lambda b, q: (0, 0)),            # gmat (f32)
            pl.BlockSpec((C, 3), lambda b, q: (0, 0)),            # gamma|beta|bl
            pl.BlockSpec((3 * C, 1), lambda b, q: (0, 0)),        # bq|bk|bv column
            pl.BlockSpec((3 * C, C), lambda b, q: (0, 0)),        # fused wqkv (bf16)
            pl.BlockSpec((C, C), lambda b, q: (0, 0)),            # wl (bf16)
        ],
        out_specs=pl.BlockSpec((1, C, TQ), lambda b, q: (b, 0, q)),
        scratch_shapes=[
            pltpu.VMEM((C, S), jnp.bfloat16),    # q (channels-major, scale folded)
            pltpu.VMEM((C, S), jnp.bfloat16),    # k
            pltpu.VMEM((C, S), jnp.bfloat16),    # v
            pltpu.VMEM((C, 2), jnp.float32),     # GN sum / sum-of-squares accum
        ],
    )

    out_bcs = pl.pallas_call(
        kernel,
        out_shape=jax.ShapeDtypeStruct((B, C, S), x_nchw.dtype),
        grid_spec=grid_spec,
        compiler_params=pltpu.CompilerParams(
            # q-tile axis depends on the per-batch persistent scratch -> arbitrary.
            dimension_semantics=("parallel", "arbitrary"),
            vmem_limit_bytes=int(vmem_limit)),
    )(x_bcs, x_bcs, gmat, consts, bqkv, wqkv, wl_bf)

    return out_bcs.reshape(B, C, H, W)


def attn_block_reference(x, p):
    """Pure-JAX reference matching the PyTorch forward, for validation."""
    B, C, H, W = x.shape
    S = H * W
    cpg = C // NUM_GROUPS
    xg = x.reshape(B, NUM_GROUPS, cpg, H, W)
    mean = jnp.mean(xg, axis=(2, 3, 4), keepdims=True)
    var = jnp.mean((xg - mean) ** 2, axis=(2, 3, 4), keepdims=True)
    h = ((xg - mean) / jnp.sqrt(var + EPS)).reshape(B, C, H, W)
    h = h * p["gn_w"][None, :, None, None] + p["gn_b"][None, :, None, None]

    def conv1x1(t, w, b):
        return jnp.einsum("bchw,oc->bohw", t, w[:, :, 0, 0]) + b[None, :, None, None]

    q = conv1x1(h, p["wq"], p["bq"]).reshape(B, C, S).transpose(0, 2, 1)  # [B,S,C]
    k = conv1x1(h, p["wk"], p["bk"]).reshape(B, C, S)                     # [B,C,S]
    v = conv1x1(h, p["wv"], p["bv"]).reshape(B, C, S)                     # [B,C,S]
    w = jnp.einsum("bsf,bft->bst", q, k) * (C ** -0.5)
    w = jax.nn.softmax(w, axis=-1)
    w = jnp.transpose(w, (0, 2, 1))
    hout = jnp.einsum("bfs,bst->bft", v, w).reshape(B, C, H, W)
    hout = conv1x1(hout, p["wl"], p["bl"])
    return x + hout


def init_params(key, C):
    ks = jax.random.split(key, 10)
    scale = 0.05
    return {
        "gn_w": jnp.ones((C,), jnp.float32) + scale * jax.random.normal(ks[0], (C,)),
        "gn_b": scale * jax.random.normal(ks[1], (C,)),
        "wq": scale * jax.random.normal(ks[2], (C, C, 1, 1), jnp.float32),
        "bq": scale * jax.random.normal(ks[3], (C,), jnp.float32),
        "wk": scale * jax.random.normal(ks[4], (C, C, 1, 1), jnp.float32),
        "bk": scale * jax.random.normal(ks[5], (C,), jnp.float32),
        "wv": scale * jax.random.normal(ks[6], (C, C, 1, 1), jnp.float32),
        "bv": scale * jax.random.normal(ks[7], (C,), jnp.float32),
        "wl": scale * jax.random.normal(ks[8], (C, C, 1, 1), jnp.float32),
        "bl": scale * jax.random.normal(ks[9], (C,), jnp.float32),
    }


if __name__ == "__main__":
    # GroupNorm(32) needs C % 32 == 0 -> C=64; H=W=16 gives S=256 so the kernel
    # exercises the multi-tile (nq=2) flash path and the per-batch precompute.
    B, C, H, W = 2, 64, 16, 16
    key = jax.random.PRNGKey(0)
    kx, kp = jax.random.split(key)
    x = jax.random.normal(kx, (B, C, H, W), jnp.float32)
    params = init_params(kp, C)

    out = jax.jit(attn_block_pallas)(x, params)
    out = jax.block_until_ready(out)

    ref = attn_block_reference(x, params)
    assert out.shape == (B, C, H, W)
    max_err = float(jnp.max(jnp.abs(out - ref)))
    # bf16 MXU operands + approx reciprocal -> looser tolerance than pure f32.
    assert jnp.allclose(out, ref, atol=2e-2, rtol=2e-2), max_err

    print("KERNEL_OK")
</pallas_src>

<mosaic_0001>
module attributes {stable_mosaic.version = 11 : i64} {
  func.func @kernel(%arg0: i32, %arg1: i32, %arg2: memref<1x64x256xf32, #tpu.memory_space<vmem>>, %arg3: memref<1x64x128xf32, #tpu.memory_space<vmem>>, %arg4: memref<64x64xf32, #tpu.memory_space<vmem>>, %arg5: memref<64x3xf32, #tpu.memory_space<vmem>>, %arg6: memref<192x1xf32, #tpu.memory_space<vmem>>, %arg7: memref<192x64xbf16, #tpu.memory_space<vmem>>, %arg8: memref<64x64xbf16, #tpu.memory_space<vmem>>, %arg9: memref<1x64x128xf32, #tpu.memory_space<vmem>>, %arg10: memref<64x256xbf16, #tpu.memory_space<vmem>>, %arg11: memref<64x256xbf16, #tpu.memory_space<vmem>>, %arg12: memref<64x256xbf16, #tpu.memory_space<vmem>>, %arg13: memref<64x2xf32, #tpu.memory_space<vmem>>) attributes {dimension_semantics = [#tpu.dimension_semantics<parallel>, #tpu.dimension_semantics<arbitrary>], iteration_bounds = array<i64: 2, 2>, scalar_prefetch = 0 : i64, scratch_operands = 4 : i64, tpu.core_type = #tpu.core_type<tc>, window_params = [{transform_indices = @transform_0, window_bounds = array<i64: 1, 64, 256>}, {transform_indices = @transform_1, window_bounds = array<i64: 1, 64, 128>}, {pipeline_mode = #tpu.pipeline_mode<synchronous>, transform_indices = @transform_2, window_bounds = array<i64: 64, 64>}, {pipeline_mode = #tpu.pipeline_mode<synchronous>, transform_indices = @transform_3, window_bounds = array<i64: 64, 3>}, {pipeline_mode = #tpu.pipeline_mode<synchronous>, transform_indices = @transform_4, window_bounds = array<i64: 192, 1>}, {pipeline_mode = #tpu.pipeline_mode<synchronous>, transform_indices = @transform_5, window_bounds = array<i64: 192, 64>}, {pipeline_mode = #tpu.pipeline_mode<synchronous>, transform_indices = @transform_6, window_bounds = array<i64: 64, 64>}, {transform_indices = @transform_7, window_bounds = array<i64: 1, 64, 128>}]} {
    %c0 = arith.constant 0 : index
    %c0_0 = arith.constant 0 : index
    %0 = vector.load %arg5[%c0, %c0_0] : memref<64x3xf32, #tpu.memory_space<vmem>>, vector<64x3xf32>
    %c0_i32 = arith.constant 0 : i32
    %1 = arith.cmpi eq, %arg1, %c0_i32 : i32
    %2 = arith.extui %1 : i1 to i32
    %c0_i32_1 = arith.constant 0 : i32
    %3 = arith.cmpi ne, %2, %c0_i32_1 : i32
    scf.if %3 {
      %cst_19 = arith.constant 0.000000e+00 : f32
      %36 = vector.broadcast %cst_19 : f32 to vector<64x2xf32>
      %c0_20 = arith.constant 0 : index
      %c0_21 = arith.constant 0 : index
      %37 = vector.load %arg13[%c0_20, %c0_21] : memref<64x2xf32, #tpu.memory_space<vmem>>, vector<64x2xf32>
      tpu.vector_store %arg13[%c0_20, %c0_21], %36 {strides = array<i32>} : memref<64x2xf32, #tpu.memory_space<vmem>>, vector<64x2xf32>,
      %c0_i32_22 = arith.constant 0 : i32
      %c256_i32 = arith.constant 256 : i32
      %38 = arith.muli %c0_i32_22, %c256_i32 : i32
      %39 = tpu.assume_multiple %38, 256 : i32
      %c0_23 = arith.constant 0 : index
      %c0_24 = arith.constant 0 : index
      %40 = arith.index_cast %39 : i32 to index
      %41 = vector.load %arg2[%c0_23, %c0_24, %40] : memref<1x64x256xf32, #tpu.memory_space<vmem>>, vector<1x64x256xf32>
      %42 = vector.shape_cast %41 : vector<1x64x256xf32> to vector<64x256xf32>
      %cst_25 = arith.constant dense<0.000000e+00> : vector<64xf32>
      %43 = vector.multi_reduction <add>, %42, %cst_25 [1] : vector<64x256xf32> to vector<64xf32>
      %44 = vector.shape_cast %43 : vector<64xf32> to vector<64x1xf32>
      %45 = arith.mulf %42, %42 : vector<64x256xf32>
      %cst_26 = arith.constant dense<0.000000e+00> : vector<64xf32>
      %46 = vector.multi_reduction <add>, %45, %cst_26 [1] : vector<64x256xf32> to vector<64xf32>
      %47 = vector.shape_cast %46 : vector<64xf32> to vector<64x1xf32>
      %c0_27 = arith.constant 0 : index
      %c0_28 = arith.constant 0 : index
      %48 = vector.load %arg13[%c0_27, %c0_28] : memref<64x2xf32, #tpu.memory_space<vmem>>, vector<64x2xf32>
      %49 = tpu.concatenate %44, %47 in 1 : vector<64x1xf32>, vector<64x1xf32> -> vector<64x2xf32>
      %50 = arith.addf %48, %49 : vector<64x2xf32>
      %c0_29 = arith.constant 0 : index
      %c0_30 = arith.constant 0 : index
      %51 = vector.load %arg13[%c0_29, %c0_30] : memref<64x2xf32, #tpu.memory_space<vmem>>, vector<64x2xf32>
      tpu.vector_store %arg13[%c0_29, %c0_30], %50 {strides = array<i32>} : memref<64x2xf32, #tpu.memory_space<vmem>>, vector<64x2xf32>,
      %c1_i32 = arith.constant 1 : i32
      %c0_31 = arith.constant 0 : index
      %c0_32 = arith.constant 0 : index
      %52 = vector.load %arg4[%c0_31, %c0_32] : memref<64x64xf32, #tpu.memory_space<vmem>>, vector<64x64xf32>
      %c0_33 = arith.constant 0 : index
      %c0_34 = arith.constant 0 : index
      %53 = vector.load %arg13[%c0_33, %c0_34] : memref<64x2xf32, #tpu.memory_space<vmem>>, vector<64x2xf32>
      %cst_35 = arith.constant dense<0.000000e+00> : vector<64x2xf32>
      %54 = tpu.matmul %52, %53, %cst_35 {dimension_numbers = #tpu.dot_dimension_numbers<[1], [0], [0], [1], [0, 0, 1, 1], [], []>} : vector<64x64xf32>, vector<64x2xf32>, vector<64x2xf32> -> vector<64x2xf32>
      %55 = vector.extract_strided_slice %54 {offsets = [0, 0], sizes = [64, 1], strides = [1, 1]} : vector<64x2xf32> to vector<64x1xf32>
      %56 = vector.extract_strided_slice %54 {offsets = [0, 1], sizes = [64, 1], strides = [1, 1]} : vector<64x2xf32> to vector<64x1xf32>
      %57 = arith.mulf %55, %55 : vector<64x1xf32>
      %58 = arith.subf %56, %57 : vector<64x1xf32>
      %cst_36 = arith.constant 0.000000e+00 : f32
      %59 = vector.broadcast %cst_36 : f32 to vector<64x1xf32>
      %60 = arith.maximumf %58, %59 : vector<64x1xf32>
      %cst_37 = arith.constant 9.99999997E-7 : f32
      %61 = vector.broadcast %cst_37 : f32 to vector<64x1xf32>
      %62 = arith.addf %60, %61 : vector<64x1xf32>
      %63 = math.rsqrt %62 : vector<64x1xf32>
      %64 = vector.extract_strided_slice %0 {offsets = [0, 0], sizes = [64, 1], strides = [1, 1]} : vector<64x3xf32> to vector<64x1xf32>
      %65 = arith.mulf %63, %64 : vector<64x1xf32>
      %66 = vector.extract_strided_slice %0 {offsets = [0, 1], sizes = [64, 1], strides = [1, 1]} : vector<64x3xf32> to vector<64x1xf32>
      %67 = arith.mulf %55, %65 : vector<64x1xf32>
      %68 = arith.subf %66, %67 : vector<64x1xf32>
      %c0_i32_38 = arith.constant 0 : i32
      %c256_i32_39 = arith.constant 256 : i32
      %69 = arith.muli %c0_i32_38, %c256_i32_39 : i32
      %70 = tpu.assume_multiple %69, 256 : i32
      %c0_40 = arith.constant 0 : index
      %c0_41 = arith.constant 0 : index
      %71 = arith.index_cast %70 : i32 to index
      %72 = vector.load %arg2[%c0_40, %c0_41, %71] : memref<1x64x256xf32, #tpu.memory_space<vmem>>, vector<1x64x256xf32>
      %73 = vector.shape_cast %72 : vector<1x64x256xf32> to vector<64x256xf32>
      %74 = vector.broadcast %65 : vector<64x1xf32> to vector<64x256xf32>
      %75 = arith.mulf %73, %74 : vector<64x256xf32>
      %76 = vector.broadcast %68 : vector<64x1xf32> to vector<64x256xf32>
      %77 = arith.addf %75, %76 : vector<64x256xf32>
      %78 = arith.truncf %77 : vector<64x256xf32> to vector<64x256xbf16>
      %c0_42 = arith.constant 0 : index
      %c0_43 = arith.constant 0 : index
      %79 = vector.load %arg7[%c0_42, %c0_43] : memref<192x64xbf16, #tpu.memory_space<vmem>>, vector<192x64xbf16>
      %cst_44 = arith.constant dense<0.000000e+00> : vector<192x256xf32>
      %80 = tpu.matmul %79, %78, %cst_44 {dimension_numbers = #tpu.dot_dimension_numbers<[1], [0], [0], [1], [0, 0, 1, 1], [], []>} : vector<192x64xbf16>, vector<64x256xbf16>, vector<192x256xf32> -> vector<192x256xf32>
      %c0_45 = arith.constant 0 : index
      %c0_46 = arith.constant 0 : index
      %81 = vector.load %arg6[%c0_45, %c0_46] : memref<192x1xf32, #tpu.memory_space<vmem>>, vector<192x1xf32>
      %82 = vector.broadcast %81 : vector<192x1xf32> to vector<192x256xf32>
      %83 = arith.addf %80, %82 : vector<192x256xf32>
      %84 = vector.extract_strided_slice %83 {offsets = [0, 0], sizes = [64, 256], strides = [1, 1]} : vector<192x256xf32> to vector<64x256xf32>
      %85 = arith.truncf %84 : vector<64x256xf32> to vector<64x256xbf16>
      %c0_47 = arith.constant 0 : index
      %86 = arith.index_cast %70 : i32 to index
      %87 = vector.load %arg10[%c0_47, %86] : memref<64x256xbf16, #tpu.memory_space<vmem>>, vector<64x256xbf16>
      tpu.vector_store %arg10[%c0_47, %86], %85 {strides = array<i32>} : memref<64x256xbf16, #tpu.memory_space<vmem>>, vector<64x256xbf16>,
      %88 = vector.extract_strided_slice %83 {offsets = [64, 0], sizes = [64, 256], strides = [1, 1]} : vector<192x256xf32> to vector<64x256xf32>
      %89 = arith.truncf %88 : vector<64x256xf32> to vector<64x256xbf16>
      %c0_48 = arith.constant 0 : index
      %90 = arith.index_cast %70 : i32 to index
      %91 = vector.load %arg11[%c0_48, %90] : memref<64x256xbf16, #tpu.memory_space<vmem>>, vector<64x256xbf16>
      tpu.vector_store %arg11[%c0_48, %90], %89 {strides = array<i32>} : memref<64x256xbf16, #tpu.memory_space<vmem>>, vector<64x256xbf16>,
      %92 = vector.extract_strided_slice %83 {offsets = [128, 0], sizes = [64, 256], strides = [1, 1]} : vector<192x256xf32> to vector<64x256xf32>
      %93 = arith.truncf %92 : vector<64x256xf32> to vector<64x256xbf16>
      %c0_49 = arith.constant 0 : index
      %94 = arith.index_cast %70 : i32 to index
      %95 = vector.load %arg12[%c0_49, %94] : memref<64x256xbf16, #tpu.memory_space<vmem>>, vector<64x256xbf16>
      tpu.vector_store %arg12[%c0_49, %94], %93 {strides = array<i32>} : memref<64x256xbf16, #tpu.memory_space<vmem>>, vector<64x256xbf16>,
      %c1_i32_50 = arith.constant 1 : i32
    } else {
    }
    %c128_i32 = arith.constant 128 : i32
    %4 = arith.muli %arg1, %c128_i32 : i32
    %5 = tpu.assume_multiple %4, 128 : i32
    %c0_2 = arith.constant 0 : index
    %6 = arith.index_cast %5 : i32 to index
    %7 = vector.load %arg10[%c0_2, %6] : memref<64x256xbf16, #tpu.memory_space<vmem>>, vector<64x128xbf16>
    %8 = tpu.transpose %7, [1, 0] : vector<64x128xbf16> -> vector<128x64xbf16>
    %c0_3 = arith.constant 0 : index
    %c0_4 = arith.constant 0 : index
    %9 = vector.load %arg11[%c0_3, %c0_4] : memref<64x256xbf16, #tpu.memory_space<vmem>>, vector<64x256xbf16>
    %cst = arith.constant dense<0.000000e+00> : vector<128x256xf32>
    %10 = tpu.matmul %8, %9, %cst {dimension_numbers = #tpu.dot_dimension_numbers<[1], [0], [0], [1], [0, 0, 1, 1], [], []>} : vector<128x64xbf16>, vector<64x256xbf16>, vector<128x256xf32> -> vector<128x256xf32>
    %cst_5 = arith.constant dense<0xFF800000> : vector<128xf32>
    %11 = vector.multi_reduction <maximumf>, %10, %cst_5 [1] : vector<128x256xf32> to vector<128xf32>
    %12 = vector.shape_cast %11 : vector<128xf32> to vector<128x1xf32>
    %13 = vector.broadcast %12 : vector<128x1xf32> to vector<128x256xf32>
    %14 = arith.subf %10, %13 : vector<128x256xf32>
    %15 = math.exp %14 : vector<128x256xf32>
    %cst_6 = arith.constant dense<0.000000e+00> : vector<128xf32>
    %16 = vector.multi_reduction <add>, %15, %cst_6 [1] : vector<128x256xf32> to vector<128xf32>
    %17 = vector.shape_cast %16 : vector<128xf32> to vector<128x1xf32>
    %18 = arith.truncf %15 : vector<128x256xf32> to vector<128x256xbf16>
    %c0_7 = arith.constant 0 : index
    %c0_8 = arith.constant 0 : index
    %19 = vector.load %arg12[%c0_7, %c0_8] : memref<64x256xbf16, #tpu.memory_space<vmem>>, vector<64x256xbf16>
    %cst_9 = arith.constant dense<0.000000e+00> : vector<128x64xf32>
    %20 = tpu.matmul %18, %19, %cst_9 {dimension_numbers = #tpu.dot_dimension_numbers<[1], [1], [0], [0], [0, 0, 1, 0], [], []>} : vector<128x256xbf16>, vector<64x256xbf16>, vector<128x64xf32> -> vector<128x64xf32>
    %21 = tpu.reciprocal %17 {approx = true} : vector<128x1xf32> -> vector<128x1xf32>
    %22 = vector.broadcast %21 : vector<128x1xf32> to vector<128x64xf32>
    %23 = arith.mulf %20, %22 : vector<128x64xf32>
    %c0_10 = arith.constant 0 : index
    %c0_11 = arith.constant 0 : index
    %24 = vector.load %arg8[%c0_10, %c0_11] : memref<64x64xbf16, #tpu.memory_space<vmem>>, vector<64x64xbf16>
    %25 = arith.truncf %23 : vector<128x64xf32> to vector<128x64xbf16>
    %cst_12 = arith.constant dense<0.000000e+00> : vector<64x128xf32>
    %26 = tpu.matmul %24, %25, %cst_12 {dimension_numbers = #tpu.dot_dimension_numbers<[1], [1], [0], [0], [0, 0, 1, 0], [], []>} : vector<64x64xbf16>, vector<128x64xbf16>, vector<64x128xf32> -> vector<64x128xf32>
    %27 = vector.extract_strided_slice %0 {offsets = [0, 2], sizes = [64, 1], strides = [1, 1]} : vector<64x3xf32> to vector<64x1xf32>
    %28 = vector.broadcast %27 : vector<64x1xf32> to vector<64x128xf32>
    %29 = arith.addf %26, %28 : vector<64x128xf32>
    %c0_13 = arith.constant 0 : index
    %c0_14 = arith.constant 0 : index
    %c0_15 = arith.constant 0 : index
    %30 = vector.load %arg3[%c0_13, %c0_14, %c0_15] : memref<1x64x128xf32, #tpu.memory_space<vmem>>, vector<1x64x128xf32>
    %31 = vector.shape_cast %30 : vector<1x64x128xf32> to vector<64x128xf32>
    %32 = arith.addf %31, %29 : vector<64x128xf32>
    %c0_16 = arith.constant 0 : index
    %c0_17 = arith.constant 0 : index
    %c0_18 = arith.constant 0 : index
    %33 = vector.load %arg9[%c0_16, %c0_17, %c0_18] : memref<1x64x128xf32, #tpu.memory_space<vmem>>, vector<1x64x128xf32>
    %34 = vector.shape_cast %33 : vector<1x64x128xf32> to vector<64x128xf32>
    %35 = vector.shape_cast %32 : vector<64x128xf32> to vector<1x64x128xf32>
    tpu.vector_store %arg9[%c0_16, %c0_17, %c0_18], %35 {strides = array<i32>} : memref<1x64x128xf32, #tpu.memory_space<vmem>>, vector<1x64x128xf32>,
    return
  }
  func.func @transform_0(%arg0: i32, %arg1: i32) -> (i32, i32, i32) {
    %c0_i32 = arith.constant 0 : i32
    %c0_i32_0 = arith.constant 0 : i32
    %c0_i32_1 = arith.constant 0 : i32
    return %arg0, %c0_i32, %c0_i32_0 : i32, i32, i32
  }
  func.func @transform_1(%arg0: i32, %arg1: i32) -> (i32, i32, i32) {
    %c0_i32 = arith.constant 0 : i32
    %c0_i32_0 = arith.constant 0 : i32
    return %arg0, %c0_i32, %arg1 : i32, i32, i32
  }
  func.func @transform_2(%arg0: i32, %arg1: i32) -> (i32, i32) {
    %c0_i32 = arith.constant 0 : i32
    %c0_i32_0 = arith.constant 0 : i32
    %c0_i32_1 = arith.constant 0 : i32
    return %c0_i32, %c0_i32_0 : i32, i32
  }
  func.func @transform_3(%arg0: i32, %arg1: i32) -> (i32, i32) {
    %c0_i32 = arith.constant 0 : i32
    %c0_i32_0 = arith.constant 0 : i32
    %c0_i32_1 = arith.constant 0 : i32
    return %c0_i32, %c0_i32_0 : i32, i32
  }
  func.func @transform_4(%arg0: i32, %arg1: i32) -> (i32, i32) {
    %c0_i32 = arith.constant 0 : i32
    %c0_i32_0 = arith.constant 0 : i32
    %c0_i32_1 = arith.constant 0 : i32
    return %c0_i32, %c0_i32_0 : i32, i32
  }
  func.func @transform_5(%arg0: i32, %arg1: i32) -> (i32, i32) {
    %c0_i32 = arith.constant 0 : i32
    %c0_i32_0 = arith.constant 0 : i32
    %c0_i32_1 = arith.constant 0 : i32
    return %c0_i32, %c0_i32_0 : i32, i32
  }
  func.func @transform_6(%arg0: i32, %arg1: i32) -> (i32, i32) {
    %c0_i32 = arith.constant 0 : i32
    %c0_i32_0 = arith.constant 0 : i32
    %c0_i32_1 = arith.constant 0 : i32
    return %c0_i32, %c0_i32_0 : i32, i32
  }
  func.func @transform_7(%arg0: i32, %arg1: i32) -> (i32, i32, i32) {
    %c0_i32 = arith.constant 0 : i32
    %c0_i32_0 = arith.constant 0 : i32
    return %arg0, %c0_i32, %arg1 : i32, i32, i32
  }
}

</mosaic_0001>

<llo_original>
// kernel: attn_block_pallas.1
$region0: #{attn_block_pallas.1}
  #allocation0 [shape = 'u32[]', space=smem, size = 0x4, offset = 0x4, fixed_abs, tag = 'smem constant byte address 0x4 - core index']
  #allocation1 [shape = 'u32[144,128]{1,0:T(1,128)}', space=vmem, size = 0x12000, scoped, tag = 'internal scratch']
  #allocation2 [shape = 'bf16[64,256]{1,0:T(16,128)(2,1)}', space=vmem, size = 0x8000, scoped, tag = 'scratch operand']
  #allocation3 [shape = 'bf16[64,256]{1,0:T(16,128)(2,1)}', space=vmem, size = 0x8000, scoped, tag = 'scratch operand']
  #allocation4 [shape = 'bf16[64,256]{1,0:T(16,128)(2,1)}', space=vmem, size = 0x8000, scoped, tag = 'scratch operand']
  #allocation5 [shape = 'f32[64,2]{1,0:T(8,128)}', space=vmem, size = 0x8000, scoped, tag = 'scratch operand']
  %s0 = inlined_call_operand.vmem [shape: f32[2,64,256], index: 0, kind: input, shape index: {}, may-alias: {0,1}]
  %s1 = inlined_call_operand.vmem [shape: f32[2,64,256], index: 1, kind: input, shape index: {}, may-alias: {0,1}]
  %s2 = inlined_call_operand.vmem [shape: f32[64,64], index: 2, kind: input, shape index: {}]
  %s3 = inlined_call_operand.vmem [shape: f32[64,3], index: 3, kind: input, shape index: {}]
  %s4 = inlined_call_operand.vmem [shape: f32[192,1], index: 4, kind: input, shape index: {}]
  %s5 = inlined_call_operand.vmem [shape: bf16[192,64], index: 5, kind: input, shape index: {}]
  %s6 = inlined_call_operand.vmem [shape: bf16[64,64], index: 6, kind: input, shape index: {}]
  %s7 = inlined_call_operand.vmem [shape: f32[2,64,256], index: 7, kind: output, shape index: {}]
  %s8 = sld [smem:[#allocation0]]
  $region137: #{attn_block_pallas.1} parent=0
    _
  %s10 = ssub.s32 1, %s8
  %s11 = scalar_select 0, %s10, %s8
  $region1: #{attn_block_pallas.1} parent=0
    #allocation6 [shape = 'u8[65536]{0}', space=vmem, size = 0x10000, scoped, tag = 'input window, operand 1']
    #allocation7 [shape = 'u8[65536]{0}', space=vmem, size = 0x10000, scoped, tag = 'output window, operand 0']
    loop: start=0, step=1, limit=6
    $region2: #{attn_block_pallas.1} parent=1 // loop_pre_header
      _
    $region3: #{attn_block_pallas.1} parent=1 // loop_header
      %s13 = sphi 0, %s17
      %p14 = scmp.ge.s32.totalorder %s13, 6
      %s20 = sphi 0, %s32
      %s21 = sphi 0, %s28
      %s22 = sphi 0, %s20
      %s23 = sphi 0, %s21
      %s24 = sphi 0, %s22
      %s25 = sphi 0, %s23
      %s35 = sphi 0, %s37
      %s38 = sphi 0, %s35
      %s39 = sphi 0, %s38
      %s55 = sphi 0, %s39
      %s63 = sphi 0, %s65
      %s66 = sphi 0, %s63
      %s67 = sphi 0, %s66
      %s83 = sphi 0, %s67
      %s87 = sphi 0, %s87
      %s89 = sphi 0, %s87
      %s90 = sphi 0, %s89
      %s104 = sphi 0, %s90
      %s108 = sphi 0, %s108
      %s110 = sphi 0, %s108
      %s111 = sphi 0, %s110
      %s125 = sphi 0, %s111
      %s129 = sphi 0, %s129
      %s131 = sphi 0, %s129
      %s132 = sphi 0, %s131
      %s146 = sphi 0, %s132
      %s150 = sphi 0, %s150
      %s152 = sphi 0, %s150
      %s153 = sphi 0, %s152
      %s167 = sphi 0, %s153
      %s171 = sphi 0, %s171
      %s173 = sphi 0, %s171
      %s174 = sphi 0, %s173
      %s188 = sphi 0, %s174
      %s196 = sphi 0, %s198
      %s199 = sphi 0, %s196
      %s200 = sphi 0, %s199
      %s216 = sphi 0, %s200
    $region4: #{attn_block_pallas.1} parent=1 // loop_header_branch
      %16 = sbr.rel (%p14) target = $region8
    $region5: #{attn_block_pallas.1} parent=1 // loop_body
      %s18 = ssub.s32 %s13, 1
      %s19 = ssub.s32 %s13, 2
      %s26 = sadd.s32 1, %s21
      %p27 = scmp.ge.s32.totalorder %s26, 2
      %s28 = scalar_select %p27, 0, %s26
      %s29 = sadd.s32 1, %s20
      %s30 = scalar_select %p27, %s29, %s20
      %p31 = scmp.ge.s32.totalorder %s30, 2
      %s32 = scalar_select %p31, 0, %s30
      %s33 = ssub.s32 %s20, %s32
      %p34 = scmp.eq.s32.totalorder %s33, 0
      %s36 = sadd.s32 %s35, 1
      %s37 = scalar_select %p34, %s35, %s36
      %p40 = pneg %p34
      %p41 = scmp.eq.s32.totalorder %s13, 3
      %p42 = por %p40, %p41
      %p43 = scmp.ne.s32.totalorder %s35, %s38
      %p44 = scmp.eq.s32.totalorder %s13, 0
      %p45 = por %p43, %p44
      %p46 = scmp.ne.s32.totalorder %s35, %s38
      %p47 = scmp.eq.s32.totalorder %s18, 3
      %p48 = por %p46, %p47
      %p49 = scmp.ne.s32.totalorder %s38, %s39
      %p50 = scmp.eq.s32.totalorder %s18, 0
      %p51 = por %p49, %p50
      %p52 = scmp.ne.s32.totalorder %s38, %s39
      %p53 = scmp.eq.s32.totalorder %s19, 3
      %p54 = por %p52, %p53
      %p56 = scmp.ne.s32.totalorder %s39, %s55
      %p57 = scmp.eq.s32.totalorder %s19, 0
      %p58 = por %p56, %p57
      %s59 = ssub.s32 %s20, %s32
      %s60 = ssub.s32 %s21, %s28
      %s61 = sor.u32 %s59, %s60
      %p62 = scmp.eq.s32.totalorder %s61, 0
      %s64 = sadd.s32 %s63, 1
      %s65 = scalar_select %p62, %s63, %s64
      %p68 = pneg %p62
      %p69 = scmp.eq.s32.totalorder %s13, 3
      %p70 = por %p68, %p69
      %p71 = scmp.ne.s32.totalorder %s63, %s66
      %p72 = scmp.eq.s32.totalorder %s13, 0
      %p73 = por %p71, %p72
      %p74 = scmp.ne.s32.totalorder %s63, %s66
      %p75 = scmp.eq.s32.totalorder %s18, 3
      %p76 = por %p74, %p75
      %p77 = scmp.ne.s32.totalorder %s66, %s67
      %p78 = scmp.eq.s32.totalorder %s18, 0
      %p79 = por %p77, %p78
      %p80 = scmp.ne.s32.totalorder %s66, %s67
      %p81 = scmp.eq.s32.totalorder %s19, 3
      %p82 = por %p80, %p81
      %p84 = scmp.ne.s32.totalorder %s67, %s83
      %p85 = scmp.eq.s32.totalorder %s19, 0
      %p86 = por %p84, %p85
      %s88 = sadd.s32 %s87, 1
      %p91 = scmp.eq.s32.totalorder %s13, 3
      %p92 = scmp.ne.s32.totalorder %s87, %s89
      %p93 = scmp.eq.s32.totalorder %s13, 0
      %p94 = por %p92, %p93
      %p95 = scmp.ne.s32.totalorder %s87, %s89
      %p96 = scmp.eq.s32.totalorder %s18, 3
      %p97 = por %p95, %p96
      %p98 = scmp.ne.s32.totalorder %s89, %s90
      %p99 = scmp.eq.s32.totalorder %s18, 0
      %p100 = por %p98, %p99
      %p101 = scmp.ne.s32.totalorder %s89, %s90
      %p102 = scmp.eq.s32.totalorder %s19, 3
      %p103 = por %p101, %p102
      %p105 = scmp.ne.s32.totalorder %s90, %s104
      %p106 = scmp.eq.s32.totalorder %s19, 0
      %p107 = por %p105, %p106
      %s109 = sadd.s32 %s108, 1
      %p112 = scmp.eq.s32.totalorder %s13, 3
      %p113 = scmp.ne.s32.totalorder %s108, %s110
      %p114 = scmp.eq.s32.totalorder %s13, 0
      %p115 = por %p113, %p114
      %p116 = scmp.ne.s32.totalorder %s108, %s110
      %p117 = scmp.eq.s32.totalorder %s18, 3
      %p118 = por %p116, %p117
      %p119 = scmp.ne.s32.totalorder %s110, %s111
      %p120 = scmp.eq.s32.totalorder %s18, 0
      %p121 = por %p119, %p120
      %p122 = scmp.ne.s32.totalorder %s110, %s111
      %p123 = scmp.eq.s32.totalorder %s19, 3
      %p124 = por %p122, %p123
      %p126 = scmp.ne.s32.totalorder %s111, %s125
      %p127 = scmp.eq.s32.totalorder %s19, 0
      %p128 = por %p126, %p127
      %s130 = sadd.s32 %s129, 1
      %p133 = scmp.eq.s32.totalorder %s13, 3
      %p134 = scmp.ne.s32.totalorder %s129, %s131
      %p135 = scmp.eq.s32.totalorder %s13, 0
      %p136 = por %p134, %p135
      %p137 = scmp.ne.s32.totalorder %s129, %s131
      %p138 = scmp.eq.s32.totalorder %s18, 3
      %p139 = por %p137, %p138
      %p140 = scmp.ne.s32.totalorder %s131, %s132
      %p141 = scmp.eq.s32.totalorder %s18, 0
      %p142 = por %p140, %p141
      %p143 = scmp.ne.s32.totalorder %s131, %s132
      %p144 = scmp.eq.s32.totalorder %s19, 3
      %p145 = por %p143, %p144
      %p147 = scmp.ne.s32.totalorder %s132, %s146
      %p148 = scmp.eq.s32.totalorder %s19, 0
      %p149 = por %p147, %p148
      %s151 = sadd.s32 %s150, 1
      %p154 = scmp.eq.s32.totalorder %s13, 3
      %p155 = scmp.ne.s32.totalorder %s150, %s152
      %p156 = scmp.eq.s32.totalorder %s13, 0
      %p157 = por %p155, %p156
      %p158 = scmp.ne.s32.totalorder %s150, %s152
      %p159 = scmp.eq.s32.totalorder %s18, 3
      %p160 = por %p158, %p159
      %p161 = scmp.ne.s32.totalorder %s152, %s153
      %p162 = scmp.eq.s32.totalorder %s18, 0
      %p163 = por %p161, %p162
      %p164 = scmp.ne.s32.totalorder %s152, %s153
      %p165 = scmp.eq.s32.totalorder %s19, 3
      %p166 = por %p164, %p165
      %p168 = scmp.ne.s32.totalorder %s153, %s167
      %p169 = scmp.eq.s32.totalorder %s19, 0
      %p170 = por %p168, %p169
      %s172 = sadd.s32 %s171, 1
      %p175 = scmp.eq.s32.totalorder %s13, 3
      %p176 = scmp.ne.s32.totalorder %s171, %s173
      %p177 = scmp.eq.s32.totalorder %s13, 0
      %p178 = por %p176, %p177
      %p179 = scmp.ne.s32.totalorder %s171, %s173
      %p180 = scmp.eq.s32.totalorder %s18, 3
      %p181 = por %p179, %p180
      %p182 = scmp.ne.s32.totalorder %s173, %s174
      %p183 = scmp.eq.s32.totalorder %s18, 0
      %p184 = por %p182, %p183
      %p185 = scmp.ne.s32.totalorder %s173, %s174
      %p186 = scmp.eq.s32.totalorder %s19, 3
      %p187 = por %p185, %p186
      %p189 = scmp.ne.s32.totalorder %s174, %s188
      %p190 = scmp.eq.s32.totalorder %s19, 0
      %p191 = por %p189, %p190
      %s192 = ssub.s32 %s20, %s32
      %s193 = ssub.s32 %s21, %s28
      %s194 = sor.u32 %s192, %s193
      %p195 = scmp.eq.s32.totalorder %s194, 0
      %s197 = sadd.s32 %s196, 1
      %s198 = scalar_select %p195, %s196, %s197
      %p201 = pneg %p195
      %p202 = scmp.eq.s32.totalorder %s13, 3
      %p203 = por %p201, %p202
      %p204 = scmp.ne.s32.totalorder %s196, %s199
      %p205 = scmp.eq.s32.totalorder %s13, 0
      %p206 = por %p204, %p205
      %p207 = scmp.ne.s32.totalorder %s196, %s199
      %p208 = scmp.eq.s32.totalorder %s18, 3
      %p209 = por %p207, %p208
      %p210 = scmp.ne.s32.totalorder %s199, %s200
      %p211 = scmp.eq.s32.totalorder %s18, 0
      %p212 = por %p210, %p211
      %p213 = scmp.ne.s32.totalorder %s199, %s200
      %p214 = scmp.eq.s32.totalorder %s19, 3
      %p215 = por %p213, %p214
      %p217 = scmp.ne.s32.totalorder %s200, %s216
      %p218 = scmp.eq.s32.totalorder %s19, 0
      %p219 = por %p217, %p218
      %p220 = scmp.le.s32.totalorder 1, %s13
      %p221 = scmp.lt.s32.totalorder %s13, 5
      %p222 = pnand %p220, %p221
      %p223 = pneg %p222
      // Predicated region
      $region9: #{attn_block_pallas.1} parent=5 // pred_check
        _
      $region10: #{attn_block_pallas.1} parent=5 // pred_check_branch
        %225 = sbr.rel (%p222) target = $region12
      $region11: #{attn_block_pallas.1} parent=5 // pred_region
        %s226 = ssub.s32 %s13, 1
        // Predicated region
        $region13: #{attn_block_pallas.1} parent=11 // pred_check
          %p227 = pneg %p100
        $region14: #{attn_block_pallas.1} parent=11 // pred_check_branch
          %229 = sbr.rel (%p227) target = $region16
        $region15: #{attn_block_pallas.1} parent=11 // pred_region
          _
        $region16: #{attn_block_pallas.1} parent=11 // pred_fallthru
          _
        // Predicated region
        $region17: #{attn_block_pallas.1} parent=11 // pred_check
          %p230 = pneg %p121
        $region18: #{attn_block_pallas.1} parent=11 // pred_check_branch
          %232 = sbr.rel (%p230) target = $region20
        $region19: #{attn_block_pallas.1} parent=11 // pred_region
          _
        $region20: #{attn_block_pallas.1} parent=11 // pred_fallthru
          _
        // Predicated region
        $region21: #{attn_block_pallas.1} parent=11 // pred_check
          %p233 = pneg %p142
        $region22: #{attn_block_pallas.1} parent=11 // pred_check_branch
          %235 = sbr.rel (%p233) target = $region24
        $region23: #{attn_block_pallas.1} parent=11 // pred_region
          _
        $region24: #{attn_block_pallas.1} parent=11 // pred_fallthru
          _
        // Predicated region
        $region25: #{attn_block_pallas.1} parent=11 // pred_check
          %p236 = pneg %p163
        $region26: #{attn_block_pallas.1} parent=11 // pred_check_branch
          %238 = sbr.rel (%p236) target = $region28
        $region27: #{attn_block_pallas.1} parent=11 // pred_region
          _
        $region28: #{attn_block_pallas.1} parent=11 // pred_fallthru
          _
        // Predicated region
        $region29: #{attn_block_pallas.1} parent=11 // pred_check
          %p239 = pneg %p184
        $region30: #{attn_block_pallas.1} parent=11 // pred_check_branch
          %241 = sbr.rel (%p239) target = $region32
        $region31: #{attn_block_pallas.1} parent=11 // pred_region
          _
        $region32: #{attn_block_pallas.1} parent=11 // pred_fallthru
          _
      $region12: #{attn_block_pallas.1} parent=5 // pred_fallthru
        _
      %p242 = scmp.lt.s32.totalorder %s13, 4
      // Predicated region
      $region33: #{attn_block_pallas.1} parent=5 // pred_check
        %p243 = pneg %p242
      $region34: #{attn_block_pallas.1} parent=5 // pred_check_branch
        %245 = sbr.rel (%p243) target = $region36
      $region35: #{attn_block_pallas.1} parent=5 // pred_region
        // Predicated region
        $region37: #{attn_block_pallas.1} parent=35 // pred_check
          %p246 = pneg %p45
        $region38: #{attn_block_pallas.1} parent=35 // pred_check_branch
          %248 = sbr.rel (%p246) target = $region40
        $region39: #{attn_block_pallas.1} parent=35 // pred_region
          %p249 = scmp.lt.s32.totalorder %s20, 1
          %s250 = scalar_select %p249, %s20, 1
          %s251 = smul.addr %s250, 16
          %s252 = smul.addr %s251, 8
          %s253 = scalar_lea.vmem %s0, %s252
        $region40: #{attn_block_pallas.1} parent=35 // pred_fallthru
          _
        // Predicated region
        $region41: #{attn_block_pallas.1} parent=35 // pred_check
          %p254 = pneg %p73
        $region42: #{attn_block_pallas.1} parent=35 // pred_check_branch
          %256 = sbr.rel (%p254) target = $region44
        $region43: #{attn_block_pallas.1} parent=35 // pred_region
          %s257 = sand.u32 %s63, 1
          %s258 = sand.u32 %s63, 1
          %s259 = smul.addr %s258, 64
          %s260 = scalar_lea.vmem [#allocation6], %s259
          %s261 = smul.addr %s20, 16
          %s262 = sadd.s32 %s21, %s261
          %s263 = smul.addr %s262, 8
          %s264 = scalar_lea.vmem %s1, %s263
          // Predicated region
          $region45: #{attn_block_pallas.1} parent=43 // pred_check
            _
          $region46: #{attn_block_pallas.1} parent=43 // pred_check_branch
            %266 = sbr.rel (0) target = $region48
          $region47: #{attn_block_pallas.1} parent=43 // pred_region
            // Predicated region
            $region49: #{attn_block_pallas.1} parent=47 // pred_check
              _
            $region50: #{attn_block_pallas.1} parent=47 // pred_check_branch
              %268 = sbr.rel (0) target = $region52
            $region51: #{attn_block_pallas.1} parent=47 // pred_region
              // Predicated region
              $region64: #{attn_block_pallas.1} parent=51 // pred_check
                _
              $region65: #{attn_block_pallas.1} parent=51 // pred_check_branch
                %297 = sbr.rel (0) target = $region67
              $region66: #{attn_block_pallas.1} parent=51 // pred_region
                loop: start=0, step=1, limit=1
                $region68: #{attn_block_pallas.1} parent=66 // loop_pre_header
                  _
                $region69: #{attn_block_pallas.1} parent=66 // loop_header
                  %s299 = sphi 0, %s303
                  %p300 = scmp.ge.s32.totalorder %s299, 1
                  %s304 = sphi %s264, %s264
                  %s305 = sphi %s260, %s260
                $region70: #{attn_block_pallas.1} parent=66 // loop_header_branch
                  %302 = sbr.rel (%p300) target = $region74
                $region71: #{attn_block_pallas.1} parent=66 // loop_body
                  %v306 = vld [vmem:[%s304] sm:$0xff]
                  %307 = vst [vmem:[%s305] sm:$0xff] %v306
                  %v308 = vld [vmem:[%s304 + $0x10] sm:$0xff]
                  %309 = vst [vmem:[%s305 + $0x8] sm:$0xff] %v308
                  %v310 = vld [vmem:[%s304 + $0x20] sm:$0xff]
                  %311 = vst [vmem:[%s305 + $0x10] sm:$0xff] %v310
                  %v312 = vld [vmem:[%s304 + $0x30] sm:$0xff]
                  %313 = vst [vmem:[%s305 + $0x18] sm:$0xff] %v312
                  %v314 = vld [vmem:[%s304 + $0x40] sm:$0xff]
                  %315 = vst [vmem:[%s305 + $0x20] sm:$0xff] %v314
                  %v316 = vld [vmem:[%s304 + $0x50] sm:$0xff]
                  %317 = vst [vmem:[%s305 + $0x28] sm:$0xff] %v316
                  %v318 = vld [vmem:[%s304 + $0x60] sm:$0xff]
                  %319 = vst [vmem:[%s305 + $0x30] sm:$0xff] %v318
                  %v320 = vld [vmem:[%s304 + $0x70] sm:$0xff]
                  %321 = vst [vmem:[%s305 + $0x38] sm:$0xff] %v320
                $region72: #{attn_block_pallas.1} parent=66 // loop_footer
                  %s303 = sadd.s32 1, %s299
                $region73: #{attn_block_pallas.1} parent=66 // loop_footer_branch
                  %298 = sbr.rel target = $region69
                $region74: #{attn_block_pallas.1} parent=66 // loop_exit
                  _
              $region67: #{attn_block_pallas.1} parent=51 // pred_fallthru
                _
              // Predicated region
              $region75: #{attn_block_pallas.1} parent=51 // pred_check
                _
              $region76: #{attn_block_pallas.1} parent=51 // pred_check_branch
                %323 = sbr.rel target = $region78
              $region77: #{attn_block_pallas.1} parent=51 // pred_region
                _
              $region78: #{attn_block_pallas.1} parent=51 // pred_fallthru
                _
            $region52: #{attn_block_pallas.1} parent=47 // pred_fallthru
              _
            // Predicated region
            $region53: #{attn_block_pallas.1} parent=47 // pred_check
              _
            $region54: #{attn_block_pallas.1} parent=47 // pred_check_branch
              %270 = sbr.rel target = $region56
            $region55: #{attn_block_pallas.1} parent=47 // pred_region
              loop: start=0, step=1, limit=1
              $region57: #{attn_block_pallas.1} parent=55 // loop_pre_header
                _
              $region58: #{attn_block_pallas.1} parent=55 // loop_header
                %s273 = sphi 0, %s277
                %p274 = scmp.ge.s32.totalorder %s273, 1
                %s278 = sphi %s264, %s264
                %s279 = sphi %s260, %s260
              $region59: #{attn_block_pallas.1} parent=55 // loop_header_branch
                %276 = sbr.rel (%p274) target = $region63
              $region60: #{attn_block_pallas.1} parent=55 // loop_body
                %v280 = vld [vmem:[%s278] sm:$0xff]
                %281 = vst [vmem:[%s279] sm:$0xff] %v280
                %v282 = vld [vmem:[%s278 + $0x10] sm:$0xff]
                %283 = vst [vmem:[%s279 + $0x8] sm:$0xff] %v282
                %v284 = vld [vmem:[%s278 + $0x20] sm:$0xff]
                %285 = vst [vmem:[%s279 + $0x10] sm:$0xff] %v284
                %v286 = vld [vmem:[%s278 + $0x30] sm:$0xff]
                %287 = vst [vmem:[%s279 + $0x18] sm:$0xff] %v286
                %v288 = vld [vmem:[%s278 + $0x40] sm:$0xff]
                %289 = vst [vmem:[%s279 + $0x20] sm:$0xff] %v288
                %v290 = vld [vmem:[%s278 + $0x50] sm:$0xff]
                %291 = vst [vmem:[%s279 + $0x28] sm:$0xff] %v290
                %v292 = vld [vmem:[%s278 + $0x60] sm:$0xff]
                %293 = vst [vmem:[%s279 + $0x30] sm:$0xff] %v292
                %v294 = vld [vmem:[%s278 + $0x70] sm:$0xff]
                %295 = vst [vmem:[%s279 + $0x38] sm:$0xff] %v294
              $region61: #{attn_block_pallas.1} parent=55 // loop_footer
                %s277 = sadd.s32 1, %s273
              $region62: #{attn_block_pallas.1} parent=55 // loop_footer_branch
                %272 = sbr.rel target = $region58
              $region63: #{attn_block_pallas.1} parent=55 // loop_exit
                _
            $region56: #{attn_block_pallas.1} parent=47 // pred_fallthru
              _
          $region48: #{attn_block_pallas.1} parent=43 // pred_fallthru
            _
          %324 = vnop
        $region44: #{attn_block_pallas.1} parent=35 // pred_fallthru
          _
      $region36: #{attn_block_pallas.1} parent=5 // pred_fallthru
        _
      %p325 = scmp.le.s32.totalorder 1, %s13
      %p326 = scmp.lt.s32.totalorder %s13, 5
      %p327 = pnand %p325, %p326
      %p328 = pneg %p327
      // Predicated region
      $region79: #{attn_block_pallas.1} parent=5 // pred_check
        _
      $region80: #{attn_block_pallas.1} parent=5 // pred_check_branch
        %330 = sbr.rel (%p327) target = $region82
      $region81: #{attn_block_pallas.1} parent=5 // pred_region
        %s331 = ssub.s32 %s13, 1
        %s332 = sand.u32 %s66, 1
        %s333 = sand.u32 %s66, 1
        %s334 = smul.addr %s333, 64
        %s335 = scalar_lea.vmem [#allocation6], %s334
        // Predicated region
        $region83: #{attn_block_pallas.1} parent=81 // pred_check
          %p336 = pneg %p79
        $region84: #{attn_block_pallas.1} parent=81 // pred_check_branch
          %338 = sbr.rel (%p336) target = $region86
        $region85: #{attn_block_pallas.1} parent=81 // pred_region
          _
        $region86: #{attn_block_pallas.1} parent=81 // pred_fallthru
          _
        %p339 = scmp.lt.s32.totalorder %s22, 1
        %s340 = scalar_select %p339, %s22, 1
        %s341 = smul.addr %s340, 16
        %s342 = smul.addr %s341, 8
        %s343 = scalar_lea.vmem %s0, %s342
        %p344 = pneg %p51
        %p345 = pneg %p48
        %s346 = sand.u32 %s66, 1
        %s347 = sand.u32 %s66, 1
        %s348 = smul.addr %s347, 64
        %s349 = scalar_lea.vmem [#allocation6], %s348
        %p350 = pneg %p79
        %p351 = pneg %p76
        %p352 = pneg %p100
        %p353 = pneg %p97
        %p354 = pneg %p121
        %p355 = pneg %p118
        %p356 = pneg %p142
        %p357 = pneg %p139
        %p358 = pneg %p163
        %p359 = pneg %p160
        %p360 = pneg %p184
        %p361 = pneg %p181
        %p362 = pneg %p212
        %p363 = pneg %p209
        %s364 = sand.u32 %s199, 1
        %s365 = sand.u32 %s199, 1
        %s366 = smul.addr %s365, 64
        %s367 = scalar_lea.vmem [#allocation7], %s366
        %p368 = scmp.lt.s32.totalorder %s22, 1
        %s369 = scalar_select %p368, %s22, 1
        %s370 = smul.addr %s369, 16
        %s371 = smul.addr %s370, 8
        %s372 = scalar_lea.vmem %s0, %s371
        %v374 = vld [vmem:[%s3] sm:$0xff]
        %v375 = vld [vmem:[%s3 + $0x8] sm:$0xff]
        %v376 = vld [vmem:[%s3 + $0x10] sm:$0xff]
        %v377 = vld [vmem:[%s3 + $0x18] sm:$0xff]
        %v378 = vld [vmem:[%s3 + $0x20] sm:$0xff]
        %v379 = vld [vmem:[%s3 + $0x28] sm:$0xff]
        %v380 = vld [vmem:[%s3 + $0x30] sm:$0xff]
        %v381 = vld [vmem:[%s3 + $0x38] sm:$0xff]
        %p382 = scmp.eq.s32.totalorder %s23, 0
        // Predicated region
        $region87: #{attn_block_pallas.1} parent=81 // pred_check
          %p383 = pneg %p382
        $region88: #{attn_block_pallas.1} parent=81 // pred_check_branch
          %385 = sbr.rel (%p383) target = $region90
        $region89: #{attn_block_pallas.1} parent=81 // pred_region
          %vm386 = vcmask 15360
          %387 = vst.msk [vmem:[#allocation5] sm:$0xff] %vm386, 0.0
          %388 = vst.msk [vmem:[#allocation5 + $0x8] sm:$0xff] %vm386, 0.0
          %389 = vst.msk [vmem:[#allocation5 + $0x10] sm:$0xff] %vm386, 0.0
          %390 = vst.msk [vmem:[#allocation5 + $0x18] sm:$0xff] %vm386, 0.0
          %391 = vst.msk [vmem:[#allocation5 + $0x20] sm:$0xff] %vm386, 0.0
          %392 = vst.msk [vmem:[#allocation5 + $0x28] sm:$0xff] %vm386, 0.0
          %393 = vst.msk [vmem:[#allocation5 + $0x30] sm:$0xff] %vm386, 0.0
          %394 = vst.msk [vmem:[#allocation5 + $0x38] sm:$0xff] %vm386, 0.0
          %v395 = vld [vmem:[%s372] sm:$0xff]
          %v396 = vld [vmem:[%s372 + $0x8] sm:$0xff]
          %v397 = vld [vmem:[%s372 + $0x10] sm:$0xff]
          %v398 = vld [vmem:[%s372 + $0x18] sm:$0xff]
          %v399 = vld [vmem:[%s372 + $0x20] sm:$0xff]
          %v400 = vld [vmem:[%s372 + $0x28] sm:$0xff]
          %v401 = vld [vmem:[%s372 + $0x30] sm:$0xff]
          %v402 = vld [vmem:[%s372 + $0x38] sm:$0xff]
          %v403 = vld [vmem:[%s372 + $0x40] sm:$0xff]
          %v404 = vld [vmem:[%s372 + $0x48] sm:$0xff]
          %v405 = vld [vmem:[%s372 + $0x50] sm:$0xff]
          %v406 = vld [vmem:[%s372 + $0x58] sm:$0xff]
          %v407 = vld [vmem:[%s372 + $0x60] sm:$0xff]
          %v408 = vld [vmem:[%s372 + $0x68] sm:$0xff]
          %v409 = vld [vmem:[%s372 + $0x70] sm:$0xff]
          %v410 = vld [vmem:[%s372 + $0x78] sm:$0xff]
          %v411 = vadd.f32 %v395, %v396
          %412 = vadd.xlane.f32.xlu0 %v411
          %v413 = vpop.xlane.xlu0 %412
          %v414 = vadd.f32 %v397, %v398
          %415 = vadd.xlane.f32.xlu0 %v414
          %v416 = vpop.xlane.xlu0 %415
          %v417 = vadd.f32 %v399, %v400
          %418 = vadd.xlane.f32.xlu0 %v417
          %v419 = vpop.xlane.xlu0 %418
          %v420 = vadd.f32 %v401, %v402
          %421 = vadd.xlane.f32.xlu0 %v420
          %v422 = vpop.xlane.xlu0 %421
          %v423 = vadd.f32 %v403, %v404
          %424 = vadd.xlane.f32.xlu0 %v423
          %v425 = vpop.xlane.xlu0 %424
          %v426 = vadd.f32 %v405, %v406
          %427 = vadd.xlane.f32.xlu0 %v426
          %v428 = vpop.xlane.xlu0 %427
          %v429 = vadd.f32 %v407, %v408
          %430 = vadd.xlane.f32.xlu0 %v429
          %v431 = vpop.xlane.xlu0 %430
          %v432 = vadd.f32 %v409, %v410
          %433 = vadd.xlane.f32.xlu0 %v432
          %v434 = vpop.xlane.xlu0 %433
          %v435 = vmul.f32 %v395, %v395
          %v436 = vmul.f32 %v396, %v396
          %v437 = vmul.f32 %v397, %v397
          %v438 = vmul.f32 %v398, %v398
          %v439 = vmul.f32 %v399, %v399
          %v440 = vmul.f32 %v400, %v400
          %v441 = vmul.f32 %v401, %v401
          %v442 = vmul.f32 %v402, %v402
          %v443 = vmul.f32 %v403, %v403
          %v444 = vmul.f32 %v404, %v404
          %v445 = vmul.f32 %v405, %v405
          %v446 = vmul.f32 %v406, %v406
          %v447 = vmul.f32 %v407, %v407
          %v448 = vmul.f32 %v408, %v408
          %v449 = vmul.f32 %v409, %v409
          %v450 = vmul.f32 %v410, %v410
          %v451 = vadd.f32 %v435, %v436
          %452 = vadd.xlane.f32.xlu0 %v451
          %v453 = vpop.xlane.xlu0 %452
          %v454 = vadd.f32 %v437, %v438
          %455 = vadd.xlane.f32.xlu0 %v454
          %v456 = vpop.xlane.xlu0 %455
          %v457 = vadd.f32 %v439, %v440
          %458 = vadd.xlane.f32.xlu0 %v457
          %v459 = vpop.xlane.xlu0 %458
          %v460 = vadd.f32 %v441, %v442
          %461 = vadd.xlane.f32.xlu0 %v460
          %v462 = vpop.xlane.xlu0 %461
          %v463 = vadd.f32 %v443, %v444
          %464 = vadd.xlane.f32.xlu0 %v463
          %v465 = vpop.xlane.xlu0 %464
          %v466 = vadd.f32 %v445, %v446
          %467 = vadd.xlane.f32.xlu0 %v466
          %v468 = vpop.xlane.xlu0 %467
          %v469 = vadd.f32 %v447, %v448
          %470 = vadd.xlane.f32.xlu0 %v469
          %v471 = vpop.xlane.xlu0 %470
          %v472 = vadd.f32 %v449, %v450
          %473 = vadd.xlane.f32.xlu0 %v472
          %v474 = vpop.xlane.xlu0 %473
          %v475 = vld [vmem:[#allocation5] sm:$0xff]
          %v476 = vld [vmem:[#allocation5 + $0x8] sm:$0xff]
          %v477 = vld [vmem:[#allocation5 + $0x10] sm:$0xff]
          %v478 = vld [vmem:[#allocation5 + $0x18] sm:$0xff]
          %v479 = vld [vmem:[#allocation5 + $0x20] sm:$0xff]
          %v480 = vld [vmem:[#allocation5 + $0x28] sm:$0xff]
          %v481 = vld [vmem:[#allocation5 + $0x30] sm:$0xff]
          %v482 = vld [vmem:[#allocation5 + $0x38] sm:$0xff]
          %vm483 = vcmask 7168
          %v484 = vsel %vm483, %v413, %v453
          %v485 = vsel %vm483, %v416, %v456
          %v486 = vsel %vm483, %v419, %v459
          %v487 = vsel %vm483, %v422, %v462
          %v488 = vsel %vm483, %v425, %v465
          %v489 = vsel %vm483, %v428, %v468
          %v490 = vsel %vm483, %v431, %v471
          %v491 = vsel %vm483, %v434, %v474
          %v492 = vadd.f32 %v475, %v484
          %v493 = vadd.f32 %v476, %v485
          %v494 = vadd.f32 %v477, %v486
          %v495 = vadd.f32 %v478, %v487
          %v496 = vadd.f32 %v479, %v488
          %v497 = vadd.f32 %v480, %v489
          %v498 = vadd.f32 %v481, %v490
          %v499 = vadd.f32 %v482, %v491
          %500 = vst.msk [vmem:[#allocation5] sm:$0xff] %vm386, %v492
          %501 = vst.msk [vmem:[#allocation5 + $0x8] sm:$0xff] %vm386, %v493
          %502 = vst.msk [vmem:[#allocation5 + $0x10] sm:$0xff] %vm386, %v494
          %503 = vst.msk [vmem:[#allocation5 + $0x18] sm:$0xff] %vm386, %v495
          %504 = vst.msk [vmem:[#allocation5 + $0x20] sm:$0xff] %vm386, %v496
          %505 = vst.msk [vmem:[#allocation5 + $0x28] sm:$0xff] %vm386, %v497
          %506 = vst.msk [vmem:[#allocation5 + $0x30] sm:$0xff] %vm386, %v498
          %507 = vst.msk [vmem:[#allocation5 + $0x38] sm:$0xff] %vm386, %v499
          %v508 = vld [vmem:[%s2] sm:$0xff]
          %v509 = vld [vmem:[%s2 + $0x8] sm:$0xff]
          %v510 = vld [vmem:[%s2 + $0x10] sm:$0xff]
          %v511 = vld [vmem:[%s2 + $0x18] sm:$0xff]
          %v512 = vld [vmem:[%s2 + $0x20] sm:$0xff]
          %v513 = vld [vmem:[%s2 + $0x28] sm:$0xff]
          %v514 = vld [vmem:[%s2 + $0x30] sm:$0xff]
          %v515 = vld [vmem:[%s2 + $0x38] sm:$0xff]
          %v516 = vld [vmem:[#allocation5] sm:$0xff]
          %v517 = vld [vmem:[#allocation5 + $0x8] sm:$0xff]
          %v518 = vld [vmem:[#allocation5 + $0x10] sm:$0xff]
          %v519 = vld [vmem:[#allocation5 + $0x18] sm:$0xff]
          %v520 = vld [vmem:[#allocation5 + $0x20] sm:$0xff]
          %v521 = vld [vmem:[#allocation5 + $0x28] sm:$0xff]
          %v522 = vld [vmem:[#allocation5 + $0x30] sm:$0xff]
          %v523 = vld [vmem:[#allocation5 + $0x38] sm:$0xff]
          %vm524 = vcmask 523264
          %v526 = vsel %vm524, %v508, 0
          %v529 = vsel %vm524, %v509, 0
          %v532 = vsel %vm524, %v510, 0
          %v535 = vsel %vm524, %v511, 0
          %v538 = vsel %vm524, %v512, 0
          %v541 = vsel %vm524, %v513, 0
          %v544 = vsel %vm524, %v514, 0
          %v547 = vsel %vm524, %v515, 0
          %549 = vmatprep.subr.mxu0 0.0
          %550 = vmatpush1.msra.mxu0 %v516
          %551 = vmatprep.subr.mxu0 0.0
          %552 = vmatpush1.msra.mxu0 %v517
          %553 = vmatprep.subr.mxu0 0.0
          %554 = vmatpush1.msra.mxu0 %v518
          %555 = vmatprep.subr.mxu0 0.0
          %556 = vmatpush1.msra.mxu0 %v519
          %557 = vmatprep.subr.mxu0 0.0
          %558 = vmatpush1.msra.mxu0 %v520
          %559 = vmatprep.subr.mxu0 0.0
          %560 = vmatpush1.msra.mxu0 %v521
          %561 = vmatprep.subr.mxu0 0.0
          %562 = vmatpush1.msra.mxu0 %v522
          %563 = vmatprep.subr.mxu0 0.0
          %564 = vmatpush1.msra.mxu0 %v523
          %565 = vmatprep.subr.mxu0 0.0
          %566 = vmatpush1.msra.mxu0 0.0
          %567 = vmatprep.subr.mxu0 0.0
          %568 = vmatpush1.msra.mxu0 0.0
          %569 = vmatprep.subr.mxu0 0.0
          %570 = vmatpush1.msra.mxu0 0.0
          %571 = vmatprep.subr.mxu0 0.0
          %572 = vmatpush1.msra.mxu0 0.0
          %573 = vmatprep.subr.mxu0 0.0
          %574 = vmatpush1.msra.mxu0 0.0
          %575 = vmatprep.subr.mxu0 0.0
          %576 = vmatpush1.msra.mxu0 0.0
          %577 = vmatprep.subr.mxu0 0.0
          %578 = vmatpush1.msra.mxu0 0.0
          %579 = vmatprep.subr.mxu0 0.0
          %580 = vmatpush1.msra.mxu0 0.0
          %581 = vmatprep.subr.mxu0 0.0
          %582 = vmatpush1.msra.mxu0 0.0
          %583 = vmatprep.subr.mxu0 0.0
          %584 = vmatpush1.msra.mxu0 0.0
          %585 = vmatprep.subr.mxu0 0.0
          %586 = vmatpush1.msra.mxu0 0.0
          %587 = vmatprep.subr.mxu0 0.0
          %588 = vmatpush1.msra.mxu0 0.0
          %589 = vmatprep.subr.mxu0 0.0
          %590 = vmatpush1.msra.mxu0 0.0
          %591 = vmatprep.subr.mxu0 0.0
          %592 = vmatpush1.msra.mxu0 0.0
          %593 = vmatprep.subr.mxu0 0.0
          %594 = vmatpush1.msra.mxu0 0.0
          %595 = vmatprep.subr.mxu0 0.0
          %596 = vmatpush1.msra.mxu0 0.0
          %597 = vmatprep.subr.mxu0 0.0
          %598 = vmatpush1.msra.mxu0 0.0
          %599 = vmatprep.subr.mxu0 0.0
          %600 = vmatpush1.msra.mxu0 0.0
          %601 = vmatprep.subr.mxu0 0.0
          %602 = vmatpush1.msra.mxu0 0.0
          %603 = vmatprep.subr.mxu0 0.0
          %604 = vmatpush1.msra.mxu0 0.0
          %605 = vmatprep.subr.mxu0 0.0
          %606 = vmatpush1.msra.mxu0 0.0
          %607 = vmatprep.subr.mxu0 0.0
          %608 = vmatpush1.msra.mxu0 0.0
          %609 = vmatprep.subr.mxu0 0.0
          %610 = vmatpush1.msra.mxu0 0.0
          %611 = vmatprep.subr.mxu0 0.0
          %612 = vmatpush1.msra.mxu0 0.0
          %613 = vmatprep.mubr.f32.mxu0 0.0
          %614 = vmatmul.mubr.f32.gmra.mrb[0].mxu0 %v526
          %v615 = vpop.f32.mrb[0].mxu0
          %v616 = vadd.f32 0.0, %v615
          %v617 = vpop.f32.mrb[0].mxu0
          %618 = vmatprep.mubr.f32.mxu0 0.0
          %619 = vmatmul.mubr.f32.gmra.mrb[0].mxu0 %v529
          %v620 = vpop.f32.mrb[0].mxu0
          %v621 = vadd.f32 0.0, %v620
          %v622 = vpop.f32.mrb[0].mxu0
          %623 = vmatprep.mubr.f32.mxu0 0.0
          %624 = vmatmul.mubr.f32.gmra.mrb[0].mxu0 %v532
          %v625 = vpop.f32.mrb[0].mxu0
          %v626 = vadd.f32 0.0, %v625
          %v627 = vpop.f32.mrb[0].mxu0
          %628 = vmatprep.mubr.f32.mxu0 0.0
          %629 = vmatmul.mubr.f32.gmra.mrb[0].mxu0 %v535
          %v630 = vpop.f32.mrb[0].mxu0
          %v631 = vadd.f32 0.0, %v630
          %v632 = vpop.f32.mrb[0].mxu0
          %633 = vmatprep.mubr.f32.mxu0 0.0
          %634 = vmatmul.mubr.f32.gmra.mrb[0].mxu0 %v538
          %v635 = vpop.f32.mrb[0].mxu0
          %v636 = vadd.f32 0.0, %v635
          %v637 = vpop.f32.mrb[0].mxu0
          %638 = vmatprep.mubr.f32.mxu0 0.0
          %639 = vmatmul.mubr.f32.gmra.mrb[0].mxu0 %v541
          %v640 = vpop.f32.mrb[0].mxu0
          %v641 = vadd.f32 0.0, %v640
          %v642 = vpop.f32.mrb[0].mxu0
          %643 = vmatprep.mubr.f32.mxu0 0.0
          %644 = vmatmul.mubr.f32.gmra.mrb[0].mxu0 %v544
          %v645 = vpop.f32.mrb[0].mxu0
          %v646 = vadd.f32 0.0, %v645
          %v647 = vpop.f32.mrb[0].mxu0
          %648 = vmatprep.mubr.f32.mxu0 0.0
          %649 = vmatmul.mubr.f32.gmra.mrb[0].mxu0 %v547
          %v650 = vpop.f32.mrb[0].mxu0
          %v651 = vadd.f32 0.0, %v650
          %v652 = vpop.f32.mrb[0].mxu0
          %653 = vdwg.mxu0
          %v654 = vmul.f32 %v616, %v616
          %v655 = vmul.f32 %v621, %v621
          %v656 = vmul.f32 %v626, %v626
          %v657 = vmul.f32 %v631, %v631
          %v658 = vmul.f32 %v636, %v636
          %v659 = vmul.f32 %v641, %v641
          %v660 = vmul.f32 %v646, %v646
          %v661 = vmul.f32 %v651, %v651
          %670 = vrot.lane.b32.xlu0 %v654, 1
          %v671 = vpop.permute.xlu0 %670
          %672 = vrot.lane.b32.xlu0 %v655, 1
          %v673 = vpop.permute.xlu0 %672
          %674 = vrot.lane.b32.xlu0 %v656, 1
          %v675 = vpop.permute.xlu0 %674
          %676 = vrot.lane.b32.xlu0 %v657, 1
          %v677 = vpop.permute.xlu0 %676
          %678 = vrot.lane.b32.xlu0 %v658, 1
          %v679 = vpop.permute.xlu0 %678
          %680 = vrot.lane.b32.xlu0 %v659, 1
          %v681 = vpop.permute.xlu0 %680
          %682 = vrot.lane.b32.xlu0 %v660, 1
          %v683 = vpop.permute.xlu0 %682
          %684 = vrot.lane.b32.xlu0 %v661, 1
          %v685 = vpop.permute.xlu0 %684
          %v694 = vsub.f32 %v616, %v671
          %v695 = vsub.f32 %v621, %v673
          %v696 = vsub.f32 %v626, %v675
          %v697 = vsub.f32 %v631, %v677
          %v698 = vsub.f32 %v636, %v679
          %v699 = vsub.f32 %v641, %v681
          %v700 = vsub.f32 %v646, %v683
          %v701 = vsub.f32 %v651, %v685
          %v702 = vmax.f32 %v694, 0.0
          %v703 = vmax.f32 %v695, 0.0
          %v704 = vmax.f32 %v696, 0.0
          %v705 = vmax.f32 %v697, 0.0
          %v706 = vmax.f32 %v698, 0.0
          %v707 = vmax.f32 %v699, 0.0
          %v708 = vmax.f32 %v700, 0.0
          %v709 = vmax.f32 %v701, 0.0
          %v710 = vadd.f32 %v702, 1e-06
          %v711 = vadd.f32 %v703, 1e-06
          %v712 = vadd.f32 %v704, 1e-06
          %v713 = vadd.f32 %v705, 1e-06
          %v714 = vadd.f32 %v706, 1e-06
          %v715 = vadd.f32 %v707, 1e-06
          %v716 = vadd.f32 %v708, 1e-06
          %v717 = vadd.f32 %v709, 1e-06
          %v718 = vrsqrt.pop %v710
          %v719 = vrsqrt.pop %v711
          %v720 = vrsqrt.pop %v712
          %v721 = vrsqrt.pop %v713
          %v722 = vrsqrt.pop %v714
          %v723 = vrsqrt.pop %v715
          %v724 = vrsqrt.pop %v716
          %v725 = vrsqrt.pop %v717
          %734 = vrot.lane.b32.xlu0 %v374, 1
          %v735 = vpop.permute.xlu0 %734
          %736 = vrot.lane.b32.xlu0 %v375, 1
          %v737 = vpop.permute.xlu0 %736
          %738 = vrot.lane.b32.xlu0 %v376, 1
          %v739 = vpop.permute.xlu0 %738
          %740 = vrot.lane.b32.xlu0 %v377, 1
          %v741 = vpop.permute.xlu0 %740
          %742 = vrot.lane.b32.xlu0 %v378, 1
          %v743 = vpop.permute.xlu0 %742
          %744 = vrot.lane.b32.xlu0 %v379, 1
          %v745 = vpop.permute.xlu0 %744
          %746 = vrot.lane.b32.xlu0 %v380, 1
          %v747 = vpop.permute.xlu0 %746
          %748 = vrot.lane.b32.xlu0 %v381, 1
          %v749 = vpop.permute.xlu0 %748
          %v758 = vmul.f32 %v718, %v735
          %v759 = vmul.f32 %v719, %v737
          %v760 = vmul.f32 %v720, %v739
          %v761 = vmul.f32 %v721, %v741
          %v762 = vmul.f32 %v722, %v743
          %v763 = vmul.f32 %v723, %v745
          %v764 = vmul.f32 %v724, %v747
          %v765 = vmul.f32 %v725, %v749
          %774 = vrot.lane.b32.xlu0 %v758, 127
          %v775 = vpop.permute.xlu0 %774
          %776 = vrot.lane.b32.xlu0 %v759, 127
          %v777 = vpop.permute.xlu0 %776
          %778 = vrot.lane.b32.xlu0 %v760, 127
          %v779 = vpop.permute.xlu0 %778
          %780 = vrot.lane.b32.xlu0 %v761, 127
          %v781 = vpop.permute.xlu0 %780
          %782 = vrot.lane.b32.xlu0 %v762, 127
          %v783 = vpop.permute.xlu0 %782
          %784 = vrot.lane.b32.xlu0 %v763, 127
          %v785 = vpop.permute.xlu0 %784
          %786 = vrot.lane.b32.xlu0 %v764, 127
          %v787 = vpop.permute.xlu0 %786
          %788 = vrot.lane.b32.xlu0 %v765, 127
          %v789 = vpop.permute.xlu0 %788
          %v798 = vmul.f32 %v616, %v775
          %v799 = vmul.f32 %v621, %v777
          %v800 = vmul.f32 %v626, %v779
          %v801 = vmul.f32 %v631, %v781
          %v802 = vmul.f32 %v636, %v783
          %v803 = vmul.f32 %v641, %v785
          %v804 = vmul.f32 %v646, %v787
          %v805 = vmul.f32 %v651, %v789
          %814 = vrot.lane.b32.xlu0 %v798, 1
          %v815 = vpop.permute.xlu0 %814
          %816 = vrot.lane.b32.xlu0 %v799, 1
          %v817 = vpop.permute.xlu0 %816
          %818 = vrot.lane.b32.xlu0 %v800, 1
          %v819 = vpop.permute.xlu0 %818
          %820 = vrot.lane.b32.xlu0 %v801, 1
          %v821 = vpop.permute.xlu0 %820
          %822 = vrot.lane.b32.xlu0 %v802, 1
          %v823 = vpop.permute.xlu0 %822
          %824 = vrot.lane.b32.xlu0 %v803, 1
          %v825 = vpop.permute.xlu0 %824
          %826 = vrot.lane.b32.xlu0 %v804, 1
          %v827 = vpop.permute.xlu0 %826
          %828 = vrot.lane.b32.xlu0 %v805, 1
          %v829 = vpop.permute.xlu0 %828
          %v838 = vsub.f32 %v374, %v815
          %v839 = vsub.f32 %v375, %v817
          %v840 = vsub.f32 %v376, %v819
          %v841 = vsub.f32 %v377, %v821
          %v842 = vsub.f32 %v378, %v823
          %v843 = vsub.f32 %v379, %v825
          %v844 = vsub.f32 %v380, %v827
          %v845 = vsub.f32 %v381, %v829
          %v846 = vld [vmem:[%s372] sm:$0xff]
          %v847 = vld [vmem:[%s372 + $0x8] sm:$0xff]
          %v848 = vld [vmem:[%s372 + $0x10] sm:$0xff]
          %v849 = vld [vmem:[%s372 + $0x18] sm:$0xff]
          %v850 = vld [vmem:[%s372 + $0x20] sm:$0xff]
          %v851 = vld [vmem:[%s372 + $0x28] sm:$0xff]
          %v852 = vld [vmem:[%s372 + $0x30] sm:$0xff]
          %v853 = vld [vmem:[%s372 + $0x38] sm:$0xff]
          %v854 = vld [vmem:[%s372 + $0x40] sm:$0xff]
          %v855 = vld [vmem:[%s372 + $0x48] sm:$0xff]
          %v856 = vld [vmem:[%s372 + $0x50] sm:$0xff]
          %v857 = vld [vmem:[%s372 + $0x58] sm:$0xff]
          %v858 = vld [vmem:[%s372 + $0x60] sm:$0xff]
          %v859 = vld [vmem:[%s372 + $0x68] sm:$0xff]
          %v860 = vld [vmem:[%s372 + $0x70] sm:$0xff]
          %v861 = vld [vmem:[%s372 + $0x78] sm:$0xff]
          %862 = vset.pattern.permute.xlu0 1
          %863 = vperm.xlu0 %862, %v758
          %v864 = vpop.permute.xlu0 %863
          %866 = vset.pattern.permute.xlu0 1
          %867 = vperm.xlu0 %866, %v759
          %v868 = vpop.permute.xlu0 %867
          %870 = vset.pattern.permute.xlu0 1
          %871 = vperm.xlu0 %870, %v760
          %v872 = vpop.permute.xlu0 %871
          %874 = vset.pattern.permute.xlu0 1
          %875 = vperm.xlu0 %874, %v761
          %v876 = vpop.permute.xlu0 %875
          %878 = vset.pattern.permute.xlu0 1
          %879 = vperm.xlu0 %878, %v762
          %v880 = vpop.permute.xlu0 %879
          %882 = vset.pattern.permute.xlu0 1
          %883 = vperm.xlu0 %882, %v763
          %v884 = vpop.permute.xlu0 %883
          %886 = vset.pattern.permute.xlu0 1
          %887 = vperm.xlu0 %886, %v764
          %v888 = vpop.permute.xlu0 %887
          %890 = vset.pattern.permute.xlu0 1
          %891 = vperm.xlu0 %890, %v765
          %v892 = vpop.permute.xlu0 %891
          %v894 = vmul.f32 %v846, %v864
          %v895 = vmul.f32 %v847, %v864
          %v896 = vmul.f32 %v848, %v868
          %v897 = vmul.f32 %v849, %v868
          %v898 = vmul.f32 %v850, %v872
          %v899 = vmul.f32 %v851, %v872
          %v900 = vmul.f32 %v852, %v876
          %v901 = vmul.f32 %v853, %v876
          %v902 = vmul.f32 %v854, %v880
          %v903 = vmul.f32 %v855, %v880
          %v904 = vmul.f32 %v856, %v884
          %v905 = vmul.f32 %v857, %v884
          %v906 = vmul.f32 %v858, %v888
          %v907 = vmul.f32 %v859, %v888
          %v908 = vmul.f32 %v860, %v892
          %v909 = vmul.f32 %v861, %v892
          %911 = vset.pattern.permute.xlu0 1
          %912 = vperm.xlu0 %911, %v838
          %v913 = vpop.permute.xlu0 %912
          %916 = vset.pattern.permute.xlu0 1
          %917 = vperm.xlu0 %916, %v839
          %v918 = vpop.permute.xlu0 %917
          %921 = vset.pattern.permute.xlu0 1
          %922 = vperm.xlu0 %921, %v840
          %v923 = vpop.permute.xlu0 %922
          %926 = vset.pattern.permute.xlu0 1
          %927 = vperm.xlu0 %926, %v841
          %v928 = vpop.permute.xlu0 %927
          %931 = vset.pattern.permute.xlu0 1
          %932 = vperm.xlu0 %931, %v842
          %v933 = vpop.permute.xlu0 %932
          %936 = vset.pattern.permute.xlu0 1
          %937 = vperm.xlu0 %936, %v843
          %v938 = vpop.permute.xlu0 %937
          %941 = vset.pattern.permute.xlu0 1
          %942 = vperm.xlu0 %941, %v844
          %v943 = vpop.permute.xlu0 %942
          %946 = vset.pattern.permute.xlu0 1
          %947 = vperm.xlu0 %946, %v845
          %v948 = vpop.permute.xlu0 %947
          %v950 = vadd.f32 %v894, %v913
          %v951 = vadd.f32 %v895, %v913
          %v952 = vadd.f32 %v896, %v918
          %v953 = vadd.f32 %v897, %v918
          %v954 = vadd.f32 %v898, %v923
          %v955 = vadd.f32 %v899, %v923
          %v956 = vadd.f32 %v900, %v928
          %v957 = vadd.f32 %v901, %v928
          %v958 = vadd.f32 %v902, %v933
          %v959 = vadd.f32 %v903, %v933
          %v960 = vadd.f32 %v904, %v938
          %v961 = vadd.f32 %v905, %v938
          %v962 = vadd.f32 %v906, %v943
          %v963 = vadd.f32 %v907, %v943
          %v964 = vadd.f32 %v908, %v948
          %v965 = vadd.f32 %v909, %v948
          %v966 = vpack.c.bf16 %v952, %v950
          %v967 = vpack.c.bf16 %v953, %v951
          %v968 = vpack.c.bf16 %v956, %v954
          %v969 = vpack.c.bf16 %v957, %v955
          %v970 = vpack.c.bf16 %v960, %v958
          %v971 = vpack.c.bf16 %v961, %v959
          %v972 = vpack.c.bf16 %v964, %v962
          %v973 = vpack.c.bf16 %v965, %v963
          %v974 = vld [vmem:[%s5] sm:$0xf]
          %v975 = vld [vmem:[%s5 + $0x4] sm:$0xf]
          %v976 = vld [vmem:[%s5 + $0x8] sm:$0xf]
          %v977 = vld [vmem:[%s5 + $0xc] sm:$0xf]
          %v978 = vld [vmem:[%s5 + $0x10] sm:$0xf]
          %v979 = vld [vmem:[%s5 + $0x14] sm:$0xf]
          %v980 = vld [vmem:[%s5 + $0x18] sm:$0xf]
          %v981 = vld [vmem:[%s5 + $0x1c] sm:$0xf]
          %v982 = vld [vmem:[%s5 + $0x20] sm:$0xf]
          %v983 = vld [vmem:[%s5 + $0x24] sm:$0xf]
          %v984 = vld [vmem:[%s5 + $0x28] sm:$0xf]
          %v985 = vld [vmem:[%s5 + $0x2c] sm:$0xf]
          %v986 = vld [vmem:[%s5 + $0x30] sm:$0xf]
          %v987 = vld [vmem:[%s5 + $0x34] sm:$0xf]
          %v988 = vld [vmem:[%s5 + $0x38] sm:$0xf]
          %v989 = vld [vmem:[%s5 + $0x3c] sm:$0xf]
          %v990 = vld [vmem:[%s5 + $0x40] sm:$0xf]
          %v991 = vld [vmem:[%s5 + $0x44] sm:$0xf]
          %v992 = vld [vmem:[%s5 + $0x48] sm:$0xf]
          %v993 = vld [vmem:[%s5 + $0x4c] sm:$0xf]
          %v994 = vld [vmem:[%s5 + $0x50] sm:$0xf]
          %v995 = vld [vmem:[%s5 + $0x54] sm:$0xf]
          %v996 = vld [vmem:[%s5 + $0x58] sm:$0xf]
          %v997 = vld [vmem:[%s5 + $0x5c] sm:$0xf]
          %v998 = vld [vmem:[%s4] sm:$0xff]
          %v999 = vld [vmem:[%s4 + $0x8] sm:$0xff]
          %v1000 = vld [vmem:[%s4 + $0x10] sm:$0xff]
          %v1001 = vld [vmem:[%s4 + $0x18] sm:$0xff]
          %v1002 = vld [vmem:[%s4 + $0x20] sm:$0xff]
          %v1003 = vld [vmem:[%s4 + $0x28] sm:$0xff]
          %v1004 = vld [vmem:[%s4 + $0x30] sm:$0xff]
          %v1005 = vld [vmem:[%s4 + $0x38] sm:$0xff]
          %v1006 = vld [vmem:[%s4 + $0x40] sm:$0xff]
          %v1007 = vld [vmem:[%s4 + $0x48] sm:$0xff]
          %v1008 = vld [vmem:[%s4 + $0x50] sm:$0xff]
          %v1009 = vld [vmem:[%s4 + $0x58] sm:$0xff]
          %v1010 = vld [vmem:[%s4 + $0x60] sm:$0xff]
          %v1011 = vld [vmem:[%s4 + $0x68] sm:$0xff]
          %v1012 = vld [vmem:[%s4 + $0x70] sm:$0xff]
          %v1013 = vld [vmem:[%s4 + $0x78] sm:$0xff]
          %v1014 = vld [vmem:[%s4 + $0x80] sm:$0xff]
          %v1015 = vld [vmem:[%s4 + $0x88] sm:$0xff]
          %v1016 = vld [vmem:[%s4 + $0x90] sm:$0xff]
          %v1017 = vld [vmem:[%s4 + $0x98] sm:$0xff]
          %v1018 = vld [vmem:[%s4 + $0xa0] sm:$0xff]
          %v1019 = vld [vmem:[%s4 + $0xa8] sm:$0xff]
          %v1020 = vld [vmem:[%s4 + $0xb0] sm:$0xff]
          %v1021 = vld [vmem:[%s4 + $0xb8] sm:$0xff]
          %1023 = vset.pattern.permute.xlu0 0
          %1024 = vperm.xlu0 %1023, %v998
          %v1025 = vpop.permute.xlu0 %1024
          %1028 = vset.pattern.permute.xlu0 0
          %1029 = vperm.xlu0 %1028, %v999
          %v1030 = vpop.permute.xlu0 %1029
          %1033 = vset.pattern.permute.xlu0 0
          %1034 = vperm.xlu0 %1033, %v1000
          %v1035 = vpop.permute.xlu0 %1034
          %1038 = vset.pattern.permute.xlu0 0
          %1039 = vperm.xlu0 %1038, %v1001
          %v1040 = vpop.permute.xlu0 %1039
          %1043 = vset.pattern.permute.xlu0 0
          %1044 = vperm.xlu0 %1043, %v1002
          %v1045 = vpop.permute.xlu0 %1044
          %1048 = vset.pattern.permute.xlu0 0
          %1049 = vperm.xlu0 %1048, %v1003
          %v1050 = vpop.permute.xlu0 %1049
          %1053 = vset.pattern.permute.xlu0 0
          %1054 = vperm.xlu0 %1053, %v1004
          %v1055 = vpop.permute.xlu0 %1054
          %1058 = vset.pattern.permute.xlu0 0
          %1059 = vperm.xlu0 %1058, %v1005
          %v1060 = vpop.permute.xlu0 %1059
          %1063 = vset.pattern.permute.xlu0 0
          %1064 = vperm.xlu0 %1063, %v1006
          %v1065 = vpop.permute.xlu0 %1064
          %1068 = vset.pattern.permute.xlu0 0
          %1069 = vperm.xlu0 %1068, %v1007
          %v1070 = vpop.permute.xlu0 %1069
          %1073 = vset.pattern.permute.xlu0 0
          %1074 = vperm.xlu0 %1073, %v1008
          %v1075 = vpop.permute.xlu0 %1074
          %1078 = vset.pattern.permute.xlu0 0
          %1079 = vperm.xlu0 %1078, %v1009
          %v1080 = vpop.permute.xlu0 %1079
          %1083 = vset.pattern.permute.xlu0 0
          %1084 = vperm.xlu0 %1083, %v1010
          %v1085 = vpop.permute.xlu0 %1084
          %1088 = vset.pattern.permute.xlu0 0
          %1089 = vperm.xlu0 %1088, %v1011
          %v1090 = vpop.permute.xlu0 %1089
          %1093 = vset.pattern.permute.xlu0 0
          %1094 = vperm.xlu0 %1093, %v1012
          %v1095 = vpop.permute.xlu0 %1094
          %1098 = vset.pattern.permute.xlu0 0
          %1099 = vperm.xlu0 %1098, %v1013
          %v1100 = vpop.permute.xlu0 %1099
          %1103 = vset.pattern.permute.xlu0 0
          %1104 = vperm.xlu0 %1103, %v1014
          %v1105 = vpop.permute.xlu0 %1104
          %1108 = vset.pattern.permute.xlu0 0
          %1109 = vperm.xlu0 %1108, %v1015
          %v1110 = vpop.permute.xlu0 %1109
          %1113 = vset.pattern.permute.xlu0 0
          %1114 = vperm.xlu0 %1113, %v1016
          %v1115 = vpop.permute.xlu0 %1114
          %1118 = vset.pattern.permute.xlu0 0
          %1119 = vperm.xlu0 %1118, %v1017
          %v1120 = vpop.permute.xlu0 %1119
          %1123 = vset.pattern.permute.xlu0 0
          %1124 = vperm.xlu0 %1123, %v1018
          %v1125 = vpop.permute.xlu0 %1124
          %1128 = vset.pattern.permute.xlu0 0
          %1129 = vperm.xlu0 %1128, %v1019
          %v1130 = vpop.permute.xlu0 %1129
          %1133 = vset.pattern.permute.xlu0 0
          %1134 = vperm.xlu0 %1133, %v1020
          %v1135 = vpop.permute.xlu0 %1134
          %1138 = vset.pattern.permute.xlu0 0
          %1139 = vperm.xlu0 %1138, %v1021
          %v1140 = vpop.permute.xlu0 %1139
          %v1166 = vunpack.c.l.b16 %v974
          %v1167 = vunpack.c.l.b16 %v975
          %v1168 = vunpack.c.l.b16 %v976
          %v1169 = vunpack.c.l.b16 %v977
          %v1170 = vunpack.c.l.b16 %v978
          %v1171 = vunpack.c.l.b16 %v979
          %v1172 = vunpack.c.l.b16 %v980
          %v1173 = vunpack.c.l.b16 %v981
          %v1174 = vunpack.c.l.b16 %v982
          %v1175 = vunpack.c.l.b16 %v983
          %v1176 = vunpack.c.l.b16 %v984
          %v1177 = vunpack.c.l.b16 %v985
          %v1178 = vunpack.c.l.b16 %v986
          %v1179 = vunpack.c.l.b16 %v987
          %v1180 = vunpack.c.l.b16 %v988
          %v1181 = vunpack.c.l.b16 %v989
          %v1182 = vunpack.c.l.b16 %v990
          %v1183 = vunpack.c.l.b16 %v991
          %v1184 = vunpack.c.l.b16 %v992
          %v1185 = vunpack.c.l.b16 %v993
          %v1186 = vunpack.c.l.b16 %v994
          %v1187 = vunpack.c.l.b16 %v995
          %v1188 = vunpack.c.l.b16 %v996
          %v1189 = vunpack.c.l.b16 %v997
          %v1190 = vpack.c.b16 %v1167, %v1166
          %v1191 = vpack.c.b16 %v1169, %v1168
          %v1192 = vpack.c.b16 %v1171, %v1170
          %v1193 = vpack.c.b16 %v1173, %v1172
          %v1194 = vpack.c.b16 %v1175, %v1174
          %v1195 = vpack.c.b16 %v1177, %v1176
          %v1196 = vpack.c.b16 %v1179, %v1178
          %v1197 = vpack.c.b16 %v1181, %v1180
          %v1198 = vpack.c.b16 %v1183, %v1182
          %v1199 = vpack.c.b16 %v1185, %v1184
          %v1200 = vpack.c.b16 %v1187, %v1186
          %v1201 = vpack.c.b16 %v1189, %v1188
          %v1203 = vsel %vm524, %v1190, 0
          %v1206 = vsel %vm524, %v1191, 0
          %v1209 = vsel %vm524, %v1192, 0
          %v1212 = vsel %vm524, %v1193, 0
          %v1215 = vsel %vm524, %v1194, 0
          %v1218 = vsel %vm524, %v1195, 0
          %v1221 = vsel %vm524, %v1196, 0
          %v1224 = vsel %vm524, %v1197, 0
          %v1227 = vsel %vm524, %v1198, 0
          %v1230 = vsel %vm524, %v1199, 0
          %v1233 = vsel %vm524, %v1200, 0
          %v1236 = vsel %vm524, %v1201, 0
          %1238 = vmatprep.subr.bf16.mxu0 %v967
          %1239 = vmatpush1.bf16.msra.mxu0 %v966
          %1240 = vmatprep.subr.bf16.mxu0 %v969
          %1241 = vmatpush1.bf16.msra.mxu0 %v968
          %1242 = vmatprep.subr.bf16.mxu0 %v971
          %1243 = vmatpush1.bf16.msra.mxu0 %v970
          %1244 = vmatprep.subr.bf16.mxu0 %v973
          %1245 = vmatpush1.bf16.msra.mxu0 %v972
          %1246 = vmatprep.subr.bf16.mxu0 0
          %1247 = vmatpush1.bf16.msra.mxu0 0
          %1248 = vmatprep.subr.bf16.mxu0 0
          %1249 = vmatpush1.bf16.msra.mxu0 0
          %1250 = vmatprep.subr.bf16.mxu0 0
          %1251 = vmatpush1.bf16.msra.mxu0 0
          %1252 = vmatprep.subr.bf16.mxu0 0
          %1253 = vmatpush1.bf16.msra.mxu0 0
          %1254 = vmatprep.subr.bf16.mxu0 0
          %1255 = vmatpush1.bf16.msra.mxu0 0
          %1256 = vmatprep.subr.bf16.mxu0 0
          %1257 = vmatpush1.bf16.msra.mxu0 0
          %1258 = vmatprep.subr.bf16.mxu0 0
          %1259 = vmatpush1.bf16.msra.mxu0 0
          %1260 = vmatprep.subr.bf16.mxu0 0
          %1261 = vmatpush1.bf16.msra.mxu0 0
          %1262 = vmatprep.subr.bf16.mxu0 0
          %1263 = vmatpush1.bf16.msra.mxu0 0
          %1264 = vmatprep.subr.bf16.mxu0 0
          %1265 = vmatpush1.bf16.msra.mxu0 0
          %1266 = vmatprep.subr.bf16.mxu0 0
          %1267 = vmatpush1.bf16.msra.mxu0 0
          %1268 = vmatprep.subr.bf16.mxu0 0
          %1269 = vmatpush1.bf16.msra.mxu0 0
          %1270 = vmatprep.mubr.bf16.mxu0 0
          %1271 = vmatmul.mubr.bf16.gmra.mrb[0].mxu0 %v1203
          %v1272 = vpop.f32.mrb[0].mxu0
          %v1273 = vadd.f32 %v1025, %v1272
          %v1274 = vpop.f32.mrb[0].mxu0
          %v1275 = vadd.f32 %v1025, %v1274
          %v1276 = vpop.f32.mrb[0].mxu0
          %v1277 = vadd.f32 %v1030, %v1276
          %v1278 = vpop.f32.mrb[0].mxu0
          %v1279 = vadd.f32 %v1030, %v1278
          %1280 = vmatprep.mubr.bf16.mxu0 0
          %1281 = vmatmul.mubr.bf16.gmra.mrb[0].mxu0 %v1206
          %v1282 = vpop.f32.mrb[0].mxu0
          %v1283 = vadd.f32 %v1035, %v1282
          %v1284 = vpop.f32.mrb[0].mxu0
          %v1285 = vadd.f32 %v1035, %v1284
          %v1286 = vpop.f32.mrb[0].mxu0
          %v1287 = vadd.f32 %v1040, %v1286
          %v1288 = vpop.f32.mrb[0].mxu0
          %v1289 = vadd.f32 %v1040, %v1288
          %1290 = vmatprep.mubr.bf16.mxu0 0
          %1291 = vmatmul.mubr.bf16.gmra.mrb[0].mxu0 %v1209
          %v1292 = vpop.f32.mrb[0].mxu0
          %v1293 = vadd.f32 %v1045, %v1292
          %v1294 = vpop.f32.mrb[0].mxu0
          %v1295 = vadd.f32 %v1045, %v1294
          %v1296 = vpop.f32.mrb[0].mxu0
          %v1297 = vadd.f32 %v1050, %v1296
          %v1298 = vpop.f32.mrb[0].mxu0
          %v1299 = vadd.f32 %v1050, %v1298
          %1300 = vmatprep.mubr.bf16.mxu0 0
          %1301 = vmatmul.mubr.bf16.gmra.mrb[0].mxu0 %v1212
          %v1302 = vpop.f32.mrb[0].mxu0
          %v1303 = vadd.f32 %v1055, %v1302
          %v1304 = vpop.f32.mrb[0].mxu0
          %v1305 = vadd.f32 %v1055, %v1304
          %v1306 = vpop.f32.mrb[0].mxu0
          %v1307 = vadd.f32 %v1060, %v1306
          %v1308 = vpop.f32.mrb[0].mxu0
          %v1309 = vadd.f32 %v1060, %v1308
          %1310 = vmatprep.mubr.bf16.mxu0 0
          %1311 = vmatmul.mubr.bf16.gmra.mrb[0].mxu0 %v1215
          %v1312 = vpop.f32.mrb[0].mxu0
          %v1313 = vadd.f32 %v1065, %v1312
          %v1314 = vpop.f32.mrb[0].mxu0
          %v1315 = vadd.f32 %v1065, %v1314
          %v1316 = vpop.f32.mrb[0].mxu0
          %v1317 = vadd.f32 %v1070, %v1316
          %v1318 = vpop.f32.mrb[0].mxu0
          %v1319 = vadd.f32 %v1070, %v1318
          %1320 = vmatprep.mubr.bf16.mxu0 0
          %1321 = vmatmul.mubr.bf16.gmra.mrb[0].mxu0 %v1218
          %v1322 = vpop.f32.mrb[0].mxu0
          %v1323 = vadd.f32 %v1075, %v1322
          %v1324 = vpop.f32.mrb[0].mxu0
          %v1325 = vadd.f32 %v1075, %v1324
          %v1326 = vpop.f32.mrb[0].mxu0
          %v1327 = vadd.f32 %v1080, %v1326
          %v1328 = vpop.f32.mrb[0].mxu0
          %v1329 = vadd.f32 %v1080, %v1328
          %1330 = vmatprep.mubr.bf16.mxu0 0
          %1331 = vmatmul.mubr.bf16.gmra.mrb[0].mxu0 %v1221
          %v1332 = vpop.f32.mrb[0].mxu0
          %v1333 = vadd.f32 %v1085, %v1332
          %v1334 = vpop.f32.mrb[0].mxu0
          %v1335 = vadd.f32 %v1085, %v1334
          %v1336 = vpop.f32.mrb[0].mxu0
          %v1337 = vadd.f32 %v1090, %v1336
          %v1338 = vpop.f32.mrb[0].mxu0
          %v1339 = vadd.f32 %v1090, %v1338
          %1340 = vmatprep.mubr.bf16.mxu0 0
          %1341 = vmatmul.mubr.bf16.gmra.mrb[0].mxu0 %v1224
          %v1342 = vpop.f32.mrb[0].mxu0
          %v1343 = vadd.f32 %v1095, %v1342
          %v1344 = vpop.f32.mrb[0].mxu0
          %v1345 = vadd.f32 %v1095, %v1344
          %v1346 = vpop.f32.mrb[0].mxu0
          %v1347 = vadd.f32 %v1100, %v1346
          %v1348 = vpop.f32.mrb[0].mxu0
          %v1349 = vadd.f32 %v1100, %v1348
          %1350 = vmatprep.mubr.bf16.mxu0 0
          %1351 = vmatmul.mubr.bf16.gmra.mrb[0].mxu0 %v1227
          %v1352 = vpop.f32.mrb[0].mxu0
          %v1353 = vadd.f32 %v1105, %v1352
          %v1354 = vpop.f32.mrb[0].mxu0
          %v1355 = vadd.f32 %v1105, %v1354
          %v1356 = vpop.f32.mrb[0].mxu0
          %v1357 = vadd.f32 %v1110, %v1356
          %v1358 = vpop.f32.mrb[0].mxu0
          %v1359 = vadd.f32 %v1110, %v1358
          %1360 = vmatprep.mubr.bf16.mxu0 0
          %1361 = vmatmul.mubr.bf16.gmra.mrb[0].mxu0 %v1230
          %v1362 = vpop.f32.mrb[0].mxu0
          %v1363 = vadd.f32 %v1115, %v1362
          %v1364 = vpop.f32.mrb[0].mxu0
          %v1365 = vadd.f32 %v1115, %v1364
          %v1366 = vpop.f32.mrb[0].mxu0
          %v1367 = vadd.f32 %v1120, %v1366
          %v1368 = vpop.f32.mrb[0].mxu0
          %v1369 = vadd.f32 %v1120, %v1368
          %1370 = vmatprep.mubr.bf16.mxu0 0
          %1371 = vmatmul.mubr.bf16.gmra.mrb[0].mxu0 %v1233
          %v1372 = vpop.f32.mrb[0].mxu0
          %v1373 = vadd.f32 %v1125, %v1372
          %v1374 = vpop.f32.mrb[0].mxu0
          %v1375 = vadd.f32 %v1125, %v1374
          %v1376 = vpop.f32.mrb[0].mxu0
          %v1377 = vadd.f32 %v1130, %v1376
          %v1378 = vpop.f32.mrb[0].mxu0
          %v1379 = vadd.f32 %v1130, %v1378
          %1380 = vmatprep.mubr.bf16.mxu0 0
          %1381 = vmatmul.mubr.bf16.gmra.mrb[0].mxu0 %v1236
          %v1382 = vpop.f32.mrb[0].mxu0
          %v1383 = vadd.f32 %v1135, %v1382
          %v1384 = vpop.f32.mrb[0].mxu0
          %v1385 = vadd.f32 %v1135, %v1384
          %v1386 = vpop.f32.mrb[0].mxu0
          %v1387 = vadd.f32 %v1140, %v1386
          %v1388 = vpop.f32.mrb[0].mxu0
          %v1389 = vadd.f32 %v1140, %v1388
          %1390 = vdwg.mxu0
          %v1391 = vpack.c.bf16 %v1277, %v1273
          %v1392 = vpack.c.bf16 %v1279, %v1275
          %v1393 = vpack.c.bf16 %v1287, %v1283
          %v1394 = vpack.c.bf16 %v1289, %v1285
          %v1395 = vpack.c.bf16 %v1297, %v1293
          %v1396 = vpack.c.bf16 %v1299, %v1295
          %v1397 = vpack.c.bf16 %v1307, %v1303
          %v1398 = vpack.c.bf16 %v1309, %v1305
          %1399 = vst [vmem:[#allocation2] sm:$0xff] %v1391
          %1400 = vst [vmem:[#allocation2 + $0x8] sm:$0xff] %v1392
          %1401 = vst [vmem:[#allocation2 + $0x10] sm:$0xff] %v1393
          %1402 = vst [vmem:[#allocation2 + $0x18] sm:$0xff] %v1394
          %1403 = vst [vmem:[#allocation2 + $0x20] sm:$0xff] %v1395
          %1404 = vst [vmem:[#allocation2 + $0x28] sm:$0xff] %v1396
          %1405 = vst [vmem:[#allocation2 + $0x30] sm:$0xff] %v1397
          %1406 = vst [vmem:[#allocation2 + $0x38] sm:$0xff] %v1398
          %v1407 = vpack.c.bf16 %v1317, %v1313
          %v1408 = vpack.c.bf16 %v1319, %v1315
          %v1409 = vpack.c.bf16 %v1327, %v1323
          %v1410 = vpack.c.bf16 %v1329, %v1325
          %v1411 = vpack.c.bf16 %v1337, %v1333
          %v1412 = vpack.c.bf16 %v1339, %v1335
          %v1413 = vpack.c.bf16 %v1347, %v1343
          %v1414 = vpack.c.bf16 %v1349, %v1345
          %1415 = vst [vmem:[#allocation3] sm:$0xff] %v1407
          %1416 = vst [vmem:[#allocation3 + $0x8] sm:$0xff] %v1408
          %1417 = vst [vmem:[#allocation3 + $0x10] sm:$0xff] %v1409
          %1418 = vst [vmem:[#allocation3 + $0x18] sm:$0xff] %v1410
          %1419 = vst [vmem:[#allocation3 + $0x20] sm:$0xff] %v1411
          %1420 = vst [vmem:[#allocation3 + $0x28] sm:$0xff] %v1412
          %1421 = vst [vmem:[#allocation3 + $0x30] sm:$0xff] %v1413
          %1422 = vst [vmem:[#allocation3 + $0x38] sm:$0xff] %v1414
          %v1423 = vpack.c.bf16 %v1357, %v1353
          %v1424 = vpack.c.bf16 %v1359, %v1355
          %v1425 = vpack.c.bf16 %v1367, %v1363
          %v1426 = vpack.c.bf16 %v1369, %v1365
          %v1427 = vpack.c.bf16 %v1377, %v1373
          %v1428 = vpack.c.bf16 %v1379, %v1375
          %v1429 = vpack.c.bf16 %v1387, %v1383
          %v1430 = vpack.c.bf16 %v1389, %v1385
          %1431 = vst [vmem:[#allocation4] sm:$0xff] %v1423
          %1432 = vst [vmem:[#allocation4 + $0x8] sm:$0xff] %v1424
          %1433 = vst [vmem:[#allocation4 + $0x10] sm:$0xff] %v1425
          %1434 = vst [vmem:[#allocation4 + $0x18] sm:$0xff] %v1426
          %1435 = vst [vmem:[#allocation4 + $0x20] sm:$0xff] %v1427
          %1436 = vst [vmem:[#allocation4 + $0x28] sm:$0xff] %v1428
          %1437 = vst [vmem:[#allocation4 + $0x30] sm:$0xff] %v1429
          %1438 = vst [vmem:[#allocation4 + $0x38] sm:$0xff] %v1430
        $region90: #{attn_block_pallas.1} parent=81 // pred_fallthru
          _
        %s1439 = smul.u32 %s23, 128
        %s1440 = sshra.s32 %s1439, 7
        %s1441 = sand.u32 %s1439, 127
        %s1442 = smul.addr %s1440, 8
        %s1443 = scalar_lea.vmem [#allocation2], %s1442
        %v1444 = vld [vmem:[%s1443] sm:$0xff]
        %v1445 = vld [vmem:[%s1443 + $0x10] sm:$0xff]
        %v1446 = vld [vmem:[%s1443 + $0x20] sm:$0xff]
        %v1447 = vld [vmem:[%s1443 + $0x30] sm:$0xff]
        %1448 = vxpose.xlu0.c.b16.start [1/8] %v1444, 128
        %1449 = vxpose.xlu0.c.b16.cont [2/8] %v1445, 128
        %1450 = vxpose.xlu0.c.b16.cont [3/8] %v1446, 128
        %1451 = vxpose.xlu0.c.b16.cont [4/8] %v1447, 128
        %1452 = vxpose.xlu0.c.b16.cont [5/8] 0, 128
        %1453 = vxpose.xlu0.c.b16.cont [6/8] 0, 128
        %1454 = vxpose.xlu0.c.b16.cont [7/8] 0, 128
        %1455 = vxpose.xlu0.c.b16.end [8/8] 0, 128
        %v1456 = vpop.trf.xlu0
        %v1457 = vpop.trf.xlu0
        %v1458 = vpop.trf.xlu0
        %v1459 = vpop.trf.xlu0
        %v1460 = vpop.trf.xlu0
        %v1461 = vpop.trf.xlu0
        %v1462 = vpop.trf.xlu0
        %v1463 = vpop.trf.xlu0
        %v1464 = vld [vmem:[#allocation3] sm:$0xff]
        %v1465 = vld [vmem:[#allocation3 + $0x8] sm:$0xff]
        %v1466 = vld [vmem:[#allocation3 + $0x10] sm:$0xff]
        %v1467 = vld [vmem:[#allocation3 + $0x18] sm:$0xff]
        %v1468 = vld [vmem:[#allocation3 + $0x20] sm:$0xff]
        %v1469 = vld [vmem:[#allocation3 + $0x28] sm:$0xff]
        %v1470 = vld [vmem:[#allocation3 + $0x30] sm:$0xff]
        %v1471 = vld [vmem:[#allocation3 + $0x38] sm:$0xff]
        %vm1472 = vcmask 523264
        %v1474 = vsel %vm1472, %v1456, 0
        %v1477 = vsel %vm1472, %v1457, 0
        %v1480 = vsel %vm1472, %v1458, 0
        %v1483 = vsel %vm1472, %v1459, 0
        %v1486 = vsel %vm1472, %v1460, 0
        %v1489 = vsel %vm1472, %v1461, 0
        %v1492 = vsel %vm1472, %v1462, 0
        %v1495 = vsel %vm1472, %v1463, 0
        %1497 = vmatprep.subr.bf16.mxu0 %v1465
        %1498 = vmatpush1.bf16.msra.mxu0 %v1464
        %1499 = vmatprep.subr.bf16.mxu0 %v1467
        %1500 = vmatpush1.bf16.msra.mxu0 %v1466
        %1501 = vmatprep.subr.bf16.mxu0 %v1469
        %1502 = vmatpush1.bf16.msra.mxu0 %v1468
        %1503 = vmatprep.subr.bf16.mxu0 %v1471
        %1504 = vmatpush1.bf16.msra.mxu0 %v1470
        %1505 = vmatprep.subr.bf16.mxu0 0
        %1506 = vmatpush1.bf16.msra.mxu0 0
        %1507 = vmatprep.subr.bf16.mxu0 0
        %1508 = vmatpush1.bf16.msra.mxu0 0
        %1509 = vmatprep.subr.bf16.mxu0 0
        %1510 = vmatpush1.bf16.msra.mxu0 0
        %1511 = vmatprep.subr.bf16.mxu0 0
        %1512 = vmatpush1.bf16.msra.mxu0 0
        %1513 = vmatprep.subr.bf16.mxu0 0
        %1514 = vmatpush1.bf16.msra.mxu0 0
        %1515 = vmatprep.subr.bf16.mxu0 0
        %1516 = vmatpush1.bf16.msra.mxu0 0
        %1517 = vmatprep.subr.bf16.mxu0 0
        %1518 = vmatpush1.bf16.msra.mxu0 0
        %1519 = vmatprep.subr.bf16.mxu0 0
        %1520 = vmatpush1.bf16.msra.mxu0 0
        %1521 = vmatprep.subr.bf16.mxu0 0
        %1522 = vmatpush1.bf16.msra.mxu0 0
        %1523 = vmatprep.subr.bf16.mxu0 0
        %1524 = vmatpush1.bf16.msra.mxu0 0
        %1525 = vmatprep.subr.bf16.mxu0 0
        %1526 = vmatpush1.bf16.msra.mxu0 0
        %1527 = vmatprep.subr.bf16.mxu0 0
        %1528 = vmatpush1.bf16.msra.mxu0 0
        %1529 = vmatprep.mubr.bf16.mxu0 0
        %1530 = vmatmul.mubr.bf16.gmra.mrb[0].mxu0 %v1474
        %v1531 = vpop.f32.mrb[0].mxu0
        %v1532 = vadd.f32 0.0, %v1531
        %v1533 = vpop.f32.mrb[0].mxu0
        %v1534 = vadd.f32 0.0, %v1533
        %v1535 = vpop.f32.mrb[0].mxu0
        %v1536 = vadd.f32 0.0, %v1535
        %v1537 = vpop.f32.mrb[0].mxu0
        %v1538 = vadd.f32 0.0, %v1537
        %1539 = vmatprep.mubr.bf16.mxu0 0
        %1540 = vmatmul.mubr.bf16.gmra.mrb[0].mxu0 %v1477
        %v1541 = vpop.f32.mrb[0].mxu0
        %v1542 = vadd.f32 0.0, %v1541
        %v1543 = vpop.f32.mrb[0].mxu0
        %v1544 = vadd.f32 0.0, %v1543
        %v1545 = vpop.f32.mrb[0].mxu0
        %v1546 = vadd.f32 0.0, %v1545
        %v1547 = vpop.f32.mrb[0].mxu0
        %v1548 = vadd.f32 0.0, %v1547
        %1549 = vmatprep.mubr.bf16.mxu0 0
        %1550 = vmatmul.mubr.bf16.gmra.mrb[0].mxu0 %v1480
        %v1551 = vpop.f32.mrb[0].mxu0
        %v1552 = vadd.f32 0.0, %v1551
        %v1553 = vpop.f32.mrb[0].mxu0
        %v1554 = vadd.f32 0.0, %v1553
        %v1555 = vpop.f32.mrb[0].mxu0
        %v1556 = vadd.f32 0.0, %v1555
        %v1557 = vpop.f32.mrb[0].mxu0
        %v1558 = vadd.f32 0.0, %v1557
        %1559 = vmatprep.mubr.bf16.mxu0 0
        %1560 = vmatmul.mubr.bf16.gmra.mrb[0].mxu0 %v1483
        %v1561 = vpop.f32.mrb[0].mxu0
        %v1562 = vadd.f32 0.0, %v1561
        %v1563 = vpop.f32.mrb[0].mxu0
        %v1564 = vadd.f32 0.0, %v1563
        %v1565 = vpop.f32.mrb[0].mxu0
        %v1566 = vadd.f32 0.0, %v1565
        %v1567 = vpop.f32.mrb[0].mxu0
        %v1568 = vadd.f32 0.0, %v1567
        %1569 = vmatprep.mubr.bf16.mxu0 0
        %1570 = vmatmul.mubr.bf16.gmra.mrb[0].mxu0 %v1486
        %v1571 = vpop.f32.mrb[0].mxu0
        %v1572 = vadd.f32 0.0, %v1571
        %v1573 = vpop.f32.mrb[0].mxu0
        %v1574 = vadd.f32 0.0, %v1573
        %v1575 = vpop.f32.mrb[0].mxu0
        %v1576 = vadd.f32 0.0, %v1575
        %v1577 = vpop.f32.mrb[0].mxu0
        %v1578 = vadd.f32 0.0, %v1577
        %1579 = vmatprep.mubr.bf16.mxu0 0
        %1580 = vmatmul.mubr.bf16.gmra.mrb[0].mxu0 %v1489
        %v1581 = vpop.f32.mrb[0].mxu0
        %v1582 = vadd.f32 0.0, %v1581
        %v1583 = vpop.f32.mrb[0].mxu0
        %v1584 = vadd.f32 0.0, %v1583
        %v1585 = vpop.f32.mrb[0].mxu0
        %v1586 = vadd.f32 0.0, %v1585
        %v1587 = vpop.f32.mrb[0].mxu0
        %v1588 = vadd.f32 0.0, %v1587
        %1589 = vmatprep.mubr.bf16.mxu0 0
        %1590 = vmatmul.mubr.bf16.gmra.mrb[0].mxu0 %v1492
        %v1591 = vpop.f32.mrb[0].mxu0
        %v1592 = vadd.f32 0.0, %v1591
        %v1593 = vpop.f32.mrb[0].mxu0
        %v1594 = vadd.f32 0.0, %v1593
        %v1595 = vpop.f32.mrb[0].mxu0
        %v1596 = vadd.f32 0.0, %v1595
        %v1597 = vpop.f32.mrb[0].mxu0
        %v1598 = vadd.f32 0.0, %v1597
        %1599 = vmatprep.mubr.bf16.mxu0 0
        %1600 = vmatmul.mubr.bf16.gmra.mrb[0].mxu0 %v1495
        %v1601 = vpop.f32.mrb[0].mxu0
        %v1602 = vadd.f32 0.0, %v1601
        %v1603 = vpop.f32.mrb[0].mxu0
        %v1604 = vadd.f32 0.0, %v1603
        %v1605 = vpop.f32.mrb[0].mxu0
        %v1606 = vadd.f32 0.0, %v1605
        %v1607 = vpop.f32.mrb[0].mxu0
        %v1608 = vadd.f32 0.0, %v1607
        %1609 = vdwg.mxu0
        %v1610 = vmax.f32 %v1532, %v1534
        %1611 = vmax.xlane.f32.xlu0 %v1610
        %v1612 = vpop.xlane.xlu0 %1611
        %v1613 = vmax.f32 %v1536, %v1538
        %1614 = vmax.xlane.f32.xlu0 %v1613
        %v1615 = vpop.xlane.xlu0 %1614
        %v1616 = vmax.f32 %v1542, %v1544
        %1617 = vmax.xlane.f32.xlu0 %v1616
        %v1618 = vpop.xlane.xlu0 %1617
        %v1619 = vmax.f32 %v1546, %v1548
        %1620 = vmax.xlane.f32.xlu0 %v1619
        %v1621 = vpop.xlane.xlu0 %1620
        %v1622 = vmax.f32 %v1552, %v1554
        %1623 = vmax.xlane.f32.xlu0 %v1622
        %v1624 = vpop.xlane.xlu0 %1623
        %v1625 = vmax.f32 %v1556, %v1558
        %1626 = vmax.xlane.f32.xlu0 %v1625
        %v1627 = vpop.xlane.xlu0 %1626
        %v1628 = vmax.f32 %v1562, %v1564
        %1629 = vmax.xlane.f32.xlu0 %v1628
        %v1630 = vpop.xlane.xlu0 %1629
        %v1631 = vmax.f32 %v1566, %v1568
        %1632 = vmax.xlane.f32.xlu0 %v1631
        %v1633 = vpop.xlane.xlu0 %1632
        %v1634 = vmax.f32 %v1572, %v1574
        %1635 = vmax.xlane.f32.xlu0 %v1634
        %v1636 = vpop.xlane.xlu0 %1635
        %v1637 = vmax.f32 %v1576, %v1578
        %1638 = vmax.xlane.f32.xlu0 %v1637
        %v1639 = vpop.xlane.xlu0 %1638
        %v1640 = vmax.f32 %v1582, %v1584
        %1641 = vmax.xlane.f32.xlu0 %v1640
        %v1642 = vpop.xlane.xlu0 %1641
        %v1643 = vmax.f32 %v1586, %v1588
        %1644 = vmax.xlane.f32.xlu0 %v1643
        %v1645 = vpop.xlane.xlu0 %1644
        %v1646 = vmax.f32 %v1592, %v1594
        %1647 = vmax.xlane.f32.xlu0 %v1646
        %v1648 = vpop.xlane.xlu0 %1647
        %v1649 = vmax.f32 %v1596, %v1598
        %1650 = vmax.xlane.f32.xlu0 %v1649
        %v1651 = vpop.xlane.xlu0 %1650
        %v1652 = vmax.f32 %v1602, %v1604
        %1653 = vmax.xlane.f32.xlu0 %v1652
        %v1654 = vpop.xlane.xlu0 %1653
        %v1655 = vmax.f32 %v1606, %v1608
        %1656 = vmax.xlane.f32.xlu0 %v1655
        %v1657 = vpop.xlane.xlu0 %1656
        %v1658 = vsub.f32 %v1532, %v1612
        %v1659 = vsub.f32 %v1534, %v1612
        %v1660 = vsub.f32 %v1536, %v1615
        %v1661 = vsub.f32 %v1538, %v1615
        %v1662 = vsub.f32 %v1542, %v1618
        %v1663 = vsub.f32 %v1544, %v1618
        %v1664 = vsub.f32 %v1546, %v1621
        %v1665 = vsub.f32 %v1548, %v1621
        %v1666 = vsub.f32 %v1552, %v1624
        %v1667 = vsub.f32 %v1554, %v1624
        %v1668 = vsub.f32 %v1556, %v1627
        %v1669 = vsub.f32 %v1558, %v1627
        %v1670 = vsub.f32 %v1562, %v1630
        %v1671 = vsub.f32 %v1564, %v1630
        %v1672 = vsub.f32 %v1566, %v1633
        %v1673 = vsub.f32 %v1568, %v1633
        %v1674 = vsub.f32 %v1572, %v1636
        %v1675 = vsub.f32 %v1574, %v1636
        %v1676 = vsub.f32 %v1576, %v1639
        %v1677 = vsub.f32 %v1578, %v1639
        %v1678 = vsub.f32 %v1582, %v1642
        %v1679 = vsub.f32 %v1584, %v1642
        %v1680 = vsub.f32 %v1586, %v1645
        %v1681 = vsub.f32 %v1588, %v1645
        %v1682 = vsub.f32 %v1592, %v1648
        %v1683 = vsub.f32 %v1594, %v1648
        %v1684 = vsub.f32 %v1596, %v1651
        %v1685 = vsub.f32 %v1598, %v1651
        %v1686 = vsub.f32 %v1602, %v1654
        %v1687 = vsub.f32 %v1604, %v1654
        %v1688 = vsub.f32 %v1606, %v1657
        %v1689 = vsub.f32 %v1608, %v1657
        %v1690 = vmul.f32 %v1658, 1.442695
        %v1691 = vpow.pop %v1690
        %v1692 = vmul.f32 %v1659, 1.442695
        %v1693 = vpow.pop %v1692
        %v1694 = vmul.f32 %v1660, 1.442695
        %v1695 = vpow.pop %v1694
        %v1696 = vmul.f32 %v1661, 1.442695
        %v1697 = vpow.pop %v1696
        %v1698 = vmul.f32 %v1662, 1.442695
        %v1699 = vpow.pop %v1698
        %v1700 = vmul.f32 %v1663, 1.442695
        %v1701 = vpow.pop %v1700
        %v1702 = vmul.f32 %v1664, 1.442695
        %v1703 = vpow.pop %v1702
        %v1704 = vmul.f32 %v1665, 1.442695
        %v1705 = vpow.pop %v1704
        %v1706 = vmul.f32 %v1666, 1.442695
        %v1707 = vpow.pop %v1706
        %v1708 = vmul.f32 %v1667, 1.442695
        %v1709 = vpow.pop %v1708
        %v1710 = vmul.f32 %v1668, 1.442695
        %v1711 = vpow.pop %v1710
        %v1712 = vmul.f32 %v1669, 1.442695
        %v1713 = vpow.pop %v1712
        %v1714 = vmul.f32 %v1670, 1.442695
        %v1715 = vpow.pop %v1714
        %v1716 = vmul.f32 %v1671, 1.442695
        %v1717 = vpow.pop %v1716
        %v1718 = vmul.f32 %v1672, 1.442695
        %v1719 = vpow.pop %v1718
        %v1720 = vmul.f32 %v1673, 1.442695
        %v1721 = vpow.pop %v1720
        %v1722 = vmul.f32 %v1674, 1.442695
        %v1723 = vpow.pop %v1722
        %v1724 = vmul.f32 %v1675, 1.442695
        %v1725 = vpow.pop %v1724
        %v1726 = vmul.f32 %v1676, 1.442695
        %v1727 = vpow.pop %v1726
        %v1728 = vmul.f32 %v1677, 1.442695
        %v1729 = vpow.pop %v1728
        %v1730 = vmul.f32 %v1678, 1.442695
        %v1731 = vpow.pop %v1730
        %v1732 = vmul.f32 %v1679, 1.442695
        %v1733 = vpow.pop %v1732
        %v1734 = vmul.f32 %v1680, 1.442695
        %v1735 = vpow.pop %v1734
        %v1736 = vmul.f32 %v1681, 1.442695
        %v1737 = vpow.pop %v1736
        %v1738 = vmul.f32 %v1682, 1.442695
        %v1739 = vpow.pop %v1738
        %v1740 = vmul.f32 %v1683, 1.442695
        %v1741 = vpow.pop %v1740
        %v1742 = vmul.f32 %v1684, 1.442695
        %v1743 = vpow.pop %v1742
        %v1744 = vmul.f32 %v1685, 1.442695
        %v1745 = vpow.pop %v1744
        %v1746 = vmul.f32 %v1686, 1.442695
        %v1747 = vpow.pop %v1746
        %v1748 = vmul.f32 %v1687, 1.442695
        %v1749 = vpow.pop %v1748
        %v1750 = vmul.f32 %v1688, 1.442695
        %v1751 = vpow.pop %v1750
        %v1752 = vmul.f32 %v1689, 1.442695
        %v1753 = vpow.pop %v1752
        %v1754 = vadd.f32 %v1691, %v1693
        %1755 = vadd.xlane.f32.xlu0 %v1754
        %v1756 = vpop.xlane.xlu0 %1755
        %v1757 = vadd.f32 %v1695, %v1697
        %1758 = vadd.xlane.f32.xlu0 %v1757
        %v1759 = vpop.xlane.xlu0 %1758
        %v1760 = vadd.f32 %v1699, %v1701
        %1761 = vadd.xlane.f32.xlu0 %v1760
        %v1762 = vpop.xlane.xlu0 %1761
        %v1763 = vadd.f32 %v1703, %v1705
        %1764 = vadd.xlane.f32.xlu0 %v1763
        %v1765 = vpop.xlane.xlu0 %1764
        %v1766 = vadd.f32 %v1707, %v1709
        %1767 = vadd.xlane.f32.xlu0 %v1766
        %v1768 = vpop.xlane.xlu0 %1767
        %v1769 = vadd.f32 %v1711, %v1713
        %1770 = vadd.xlane.f32.xlu0 %v1769
        %v1771 = vpop.xlane.xlu0 %1770
        %v1772 = vadd.f32 %v1715, %v1717
        %1773 = vadd.xlane.f32.xlu0 %v1772
        %v1774 = vpop.xlane.xlu0 %1773
        %v1775 = vadd.f32 %v1719, %v1721
        %1776 = vadd.xlane.f32.xlu0 %v1775
        %v1777 = vpop.xlane.xlu0 %1776
        %v1778 = vadd.f32 %v1723, %v1725
        %1779 = vadd.xlane.f32.xlu0 %v1778
        %v1780 = vpop.xlane.xlu0 %1779
        %v1781 = vadd.f32 %v1727, %v1729
        %1782 = vadd.xlane.f32.xlu0 %v1781
        %v1783 = vpop.xlane.xlu0 %1782
        %v1784 = vadd.f32 %v1731, %v1733
        %1785 = vadd.xlane.f32.xlu0 %v1784
        %v1786 = vpop.xlane.xlu0 %1785
        %v1787 = vadd.f32 %v1735, %v1737
        %1788 = vadd.xlane.f32.xlu0 %v1787
        %v1789 = vpop.xlane.xlu0 %1788
        %v1790 = vadd.f32 %v1739, %v1741
        %1791 = vadd.xlane.f32.xlu0 %v1790
        %v1792 = vpop.xlane.xlu0 %1791
        %v1793 = vadd.f32 %v1743, %v1745
        %1794 = vadd.xlane.f32.xlu0 %v1793
        %v1795 = vpop.xlane.xlu0 %1794
        %v1796 = vadd.f32 %v1747, %v1749
        %1797 = vadd.xlane.f32.xlu0 %v1796
        %v1798 = vpop.xlane.xlu0 %1797
        %v1799 = vadd.f32 %v1751, %v1753
        %1800 = vadd.xlane.f32.xlu0 %v1799
        %v1801 = vpop.xlane.xlu0 %1800
        %v1802 = vpack.c.bf16 %v1695, %v1691
        %v1803 = vpack.c.bf16 %v1697, %v1693
        %v1804 = vpack.c.bf16 %v1703, %v1699
        %v1805 = vpack.c.bf16 %v1705, %v1701
        %v1806 = vpack.c.bf16 %v1711, %v1707
        %v1807 = vpack.c.bf16 %v1713, %v1709
        %v1808 = vpack.c.bf16 %v1719, %v1715
        %v1809 = vpack.c.bf16 %v1721, %v1717
        %v1810 = vpack.c.bf16 %v1727, %v1723
        %v1811 = vpack.c.bf16 %v1729, %v1725
        %v1812 = vpack.c.bf16 %v1735, %v1731
        %v1813 = vpack.c.bf16 %v1737, %v1733
        %v1814 = vpack.c.bf16 %v1743, %v1739
        %v1815 = vpack.c.bf16 %v1745, %v1741
        %v1816 = vpack.c.bf16 %v1751, %v1747
        %v1817 = vpack.c.bf16 %v1753, %v1749
        %v1818 = vld [vmem:[#allocation4] sm:$0xff]
        %v1819 = vld [vmem:[#allocation4 + $0x8] sm:$0xff]
        %v1820 = vld [vmem:[#allocation4 + $0x10] sm:$0xff]
        %v1821 = vld [vmem:[#allocation4 + $0x18] sm:$0xff]
        %v1822 = vld [vmem:[#allocation4 + $0x20] sm:$0xff]
        %v1823 = vld [vmem:[#allocation4 + $0x28] sm:$0xff]
        %v1824 = vld [vmem:[#allocation4 + $0x30] sm:$0xff]
        %v1825 = vld [vmem:[#allocation4 + $0x38] sm:$0xff]
        %1826 = vmatprep.subr.bf16.mxu0 %v1819
        %1827 = vmatpush1.bf16.xpose.msra.mxu0 %v1818
        %1828 = vmatprep.subr.bf16.mxu0 %v1821
        %1829 = vmatpush1.bf16.xpose.msra.mxu0 %v1820
        %1830 = vmatprep.subr.bf16.mxu0 %v1823
        %1831 = vmatpush1.bf16.xpose.msra.mxu0 %v1822
        %1832 = vmatprep.subr.bf16.mxu0 %v1825
        %1833 = vmatpush1.bf16.xpose.msra.mxu0 %v1824
        %1834 = vmatprep.subr.bf16.mxu0 0
        %1835 = vmatpush1.bf16.xpose.msra.mxu0 0
        %1836 = vmatprep.subr.bf16.mxu0 0
        %1837 = vmatpush1.bf16.xpose.msra.mxu0 0
        %1838 = vmatprep.subr.bf16.mxu0 0
        %1839 = vmatpush1.bf16.xpose.msra.mxu0 0
        %1840 = vmatprep.subr.bf16.mxu0 0
        %1841 = vmatpush1.bf16.xpose.msra.mxu0 0
        %1842 = vmatprep.subr.bf16.mxu0 0
        %1843 = vmatpush1.bf16.xpose.msra.mxu0 0
        %1844 = vmatprep.subr.bf16.mxu0 0
        %1845 = vmatpush1.bf16.xpose.msra.mxu0 0
        %1846 = vmatprep.subr.bf16.mxu0 0
        %1847 = vmatpush1.bf16.xpose.msra.mxu0 0
        %1848 = vmatprep.subr.bf16.mxu0 0
        %1849 = vmatpush1.bf16.xpose.msra.mxu0 0
        %1850 = vmatprep.subr.bf16.mxu0 0
        %1851 = vmatpush1.bf16.xpose.msra.mxu0 0
        %1852 = vmatprep.subr.bf16.mxu0 0
        %1853 = vmatpush1.bf16.xpose.msra.mxu0 0
        %1854 = vmatprep.subr.bf16.mxu0 0
        %1855 = vmatpush1.bf16.xpose.msra.mxu0 0
        %1856 = vmatprep.subr.bf16.mxu0 0
        %1857 = vmatpush1.bf16.xpose.msra.mxu0 0
        %1858 = vmatprep.mubr.bf16.mxu0 %v1803
        %1859 = vmatmul.mubr.bf16.gmra.mrb[0].mxu0 %v1802
        %v1860 = vpop.f32.mrb[0].mxu0
        %v1861 = vadd.f32 0.0, %v1860
        %v1862 = vpop.f32.mrb[0].mxu0
        %v1863 = vpop.f32.mrb[0].mxu0
        %v1864 = vadd.f32 0.0, %v1863
        %v1865 = vpop.f32.mrb[0].mxu0
        %1866 = vmatprep.mubr.bf16.mxu0 %v1805
        %1867 = vmatmul.mubr.bf16.gmra.mrb[0].mxu0 %v1804
        %v1868 = vpop.f32.mrb[0].mxu0
        %v1869 = vadd.f32 0.0, %v1868
        %v1870 = vpop.f32.mrb[0].mxu0
        %v1871 = vpop.f32.mrb[0].mxu0
        %v1872 = vadd.f32 0.0, %v1871
        %v1873 = vpop.f32.mrb[0].mxu0
        %1874 = vmatprep.mubr.bf16.mxu0 %v1807
        %1875 = vmatmul.mubr.bf16.gmra.mrb[0].mxu0 %v1806
        %v1876 = vpop.f32.mrb[0].mxu0
        %v1877 = vadd.f32 0.0, %v1876
        %v1878 = vpop.f32.mrb[0].mxu0
        %v1879 = vpop.f32.mrb[0].mxu0
        %v1880 = vadd.f32 0.0, %v1879
        %v1881 = vpop.f32.mrb[0].mxu0
        %1882 = vmatprep.mubr.bf16.mxu0 %v1809
        %1883 = vmatmul.mubr.bf16.gmra.mrb[0].mxu0 %v1808
        %v1884 = vpop.f32.mrb[0].mxu0
        %v1885 = vadd.f32 0.0, %v1884
        %v1886 = vpop.f32.mrb[0].mxu0
        %v1887 = vpop.f32.mrb[0].mxu0
        %v1888 = vadd.f32 0.0, %v1887
        %v1889 = vpop.f32.mrb[0].mxu0
        %1890 = vmatprep.mubr.bf16.mxu0 %v1811
        %1891 = vmatmul.mubr.bf16.gmra.mrb[0].mxu0 %v1810
        %v1892 = vpop.f32.mrb[0].mxu0
        %v1893 = vadd.f32 0.0, %v1892
        %v1894 = vpop.f32.mrb[0].mxu0
        %v1895 = vpop.f32.mrb[0].mxu0
        %v1896 = vadd.f32 0.0, %v1895
        %v1897 = vpop.f32.mrb[0].mxu0
        %1898 = vmatprep.mubr.bf16.mxu0 %v1813
        %1899 = vmatmul.mubr.bf16.gmra.mrb[0].mxu0 %v1812
        %v1900 = vpop.f32.mrb[0].mxu0
        %v1901 = vadd.f32 0.0, %v1900
        %v1902 = vpop.f32.mrb[0].mxu0
        %v1903 = vpop.f32.mrb[0].mxu0
        %v1904 = vadd.f32 0.0, %v1903
        %v1905 = vpop.f32.mrb[0].mxu0
        %1906 = vmatprep.mubr.bf16.mxu0 %v1815
        %1907 = vmatmul.mubr.bf16.gmra.mrb[0].mxu0 %v1814
        %v1908 = vpop.f32.mrb[0].mxu0
        %v1909 = vadd.f32 0.0, %v1908
        %v1910 = vpop.f32.mrb[0].mxu0
        %v1911 = vpop.f32.mrb[0].mxu0
        %v1912 = vadd.f32 0.0, %v1911
        %v1913 = vpop.f32.mrb[0].mxu0
        %1914 = vmatprep.mubr.bf16.mxu0 %v1817
        %1915 = vmatmul.mubr.bf16.gmra.mrb[0].mxu0 %v1816
        %v1916 = vpop.f32.mrb[0].mxu0
        %v1917 = vadd.f32 0.0, %v1916
        %v1918 = vpop.f32.mrb[0].mxu0
        %v1919 = vpop.f32.mrb[0].mxu0
        %v1920 = vadd.f32 0.0, %v1919
        %v1921 = vpop.f32.mrb[0].mxu0
        %1922 = vdwg.mxu0
        %v1923 = vrcp.pop %v1756
        %v1924 = vrcp.pop %v1759
        %v1925 = vrcp.pop %v1762
        %v1926 = vrcp.pop %v1765
        %v1927 = vrcp.pop %v1768
        %v1928 = vrcp.pop %v1771
        %v1929 = vrcp.pop %v1774
        %v1930 = vrcp.pop %v1777
        %v1931 = vrcp.pop %v1780
        %v1932 = vrcp.pop %v1783
        %v1933 = vrcp.pop %v1786
        %v1934 = vrcp.pop %v1789
        %v1935 = vrcp.pop %v1792
        %v1936 = vrcp.pop %v1795
        %v1937 = vrcp.pop %v1798
        %v1938 = vrcp.pop %v1801
        %v1939 = vmul.f32 %v1861, %v1923
        %v1940 = vmul.f32 %v1864, %v1924
        %v1941 = vmul.f32 %v1869, %v1925
        %v1942 = vmul.f32 %v1872, %v1926
        %v1943 = vmul.f32 %v1877, %v1927
        %v1944 = vmul.f32 %v1880, %v1928
        %v1945 = vmul.f32 %v1885, %v1929
        %v1946 = vmul.f32 %v1888, %v1930
        %v1947 = vmul.f32 %v1893, %v1931
        %v1948 = vmul.f32 %v1896, %v1932
        %v1949 = vmul.f32 %v1901, %v1933
        %v1950 = vmul.f32 %v1904, %v1934
        %v1951 = vmul.f32 %v1909, %v1935
        %v1952 = vmul.f32 %v1912, %v1936
        %v1953 = vmul.f32 %v1917, %v1937
        %v1954 = vmul.f32 %v1920, %v1938
        %v1955 = vld [vmem:[%s6] sm:$0xf]
        %v1956 = vld [vmem:[%s6 + $0x4] sm:$0xf]
        %v1957 = vld [vmem:[%s6 + $0x8] sm:$0xf]
        %v1958 = vld [vmem:[%s6 + $0xc] sm:$0xf]
        %v1959 = vld [vmem:[%s6 + $0x10] sm:$0xf]
        %v1960 = vld [vmem:[%s6 + $0x14] sm:$0xf]
        %v1961 = vld [vmem:[%s6 + $0x18] sm:$0xf]
        %v1962 = vld [vmem:[%s6 + $0x1c] sm:$0xf]
        %v1963 = vpack.c.bf16 %v1940, %v1939
        %v1964 = vpack.c.bf16 %v1942, %v1941
        %v1965 = vpack.c.bf16 %v1944, %v1943
        %v1966 = vpack.c.bf16 %v1946, %v1945
        %v1967 = vpack.c.bf16 %v1948, %v1947
        %v1968 = vpack.c.bf16 %v1950, %v1949
        %v1969 = vpack.c.bf16 %v1952, %v1951
        %v1970 = vpack.c.bf16 %v1954, %v1953
        %1972 = vset.pattern.permute.xlu0 2
        %1973 = vperm.xlu0 %1972, %v374
        %v1974 = vpop.permute.xlu0 %1973
        %1977 = vset.pattern.permute.xlu0 2
        %1978 = vperm.xlu0 %1977, %v375
        %v1979 = vpop.permute.xlu0 %1978
        %1982 = vset.pattern.permute.xlu0 2
        %1983 = vperm.xlu0 %1982, %v376
        %v1984 = vpop.permute.xlu0 %1983
        %1987 = vset.pattern.permute.xlu0 2
        %1988 = vperm.xlu0 %1987, %v377
        %v1989 = vpop.permute.xlu0 %1988
        %1992 = vset.pattern.permute.xlu0 2
        %1993 = vperm.xlu0 %1992, %v378
        %v1994 = vpop.permute.xlu0 %1993
        %1997 = vset.pattern.permute.xlu0 2
        %1998 = vperm.xlu0 %1997, %v379
        %v1999 = vpop.permute.xlu0 %1998
        %2002 = vset.pattern.permute.xlu0 2
        %2003 = vperm.xlu0 %2002, %v380
        %v2004 = vpop.permute.xlu0 %2003
        %2007 = vset.pattern.permute.xlu0 2
        %2008 = vperm.xlu0 %2007, %v381
        %v2009 = vpop.permute.xlu0 %2008
        %v2019 = vunpack.c.l.b16 %v1955
        %v2020 = vunpack.c.l.b16 %v1956
        %v2021 = vunpack.c.l.b16 %v1957
        %v2022 = vunpack.c.l.b16 %v1958
        %v2023 = vunpack.c.l.b16 %v1959
        %v2024 = vunpack.c.l.b16 %v1960
        %v2025 = vunpack.c.l.b16 %v1961
        %v2026 = vunpack.c.l.b16 %v1962
        %v2027 = vpack.c.b16 %v2020, %v2019
        %v2028 = vpack.c.b16 %v2022, %v2021
        %v2029 = vpack.c.b16 %v2024, %v2023
        %v2030 = vpack.c.b16 %v2026, %v2025
        %v2032 = vsel %vm1472, %v2027, 0
        %v2035 = vsel %vm1472, %v2028, 0
        %v2038 = vsel %vm1472, %v2029, 0
        %v2041 = vsel %vm1472, %v2030, 0
        %v2044 = vsel %vm1472, %v1963, 0
        %v2047 = vsel %vm1472, %v1964, 0
        %v2050 = vsel %vm1472, %v1965, 0
        %v2053 = vsel %vm1472, %v1966, 0
        %v2056 = vsel %vm1472, %v1967, 0
        %v2059 = vsel %vm1472, %v1968, 0
        %v2062 = vsel %vm1472, %v1969, 0
        %v2065 = vsel %vm1472, %v1970, 0
        %2067 = vmatprep.subr.bf16.mxu0 0
        %2068 = vmatpush1.bf16.xpose.msra.mxu0 %v2044
        %2069 = vmatprep.subr.bf16.mxu0 0
        %2070 = vmatpush1.bf16.xpose.msra.mxu0 %v2047
        %2071 = vmatprep.subr.bf16.mxu0 0
        %2072 = vmatpush1.bf16.xpose.msra.mxu0 %v2050
        %2073 = vmatprep.subr.bf16.mxu0 0
        %2074 = vmatpush1.bf16.xpose.msra.mxu0 %v2053
        %2075 = vmatprep.subr.bf16.mxu0 0
        %2076 = vmatpush1.bf16.xpose.msra.mxu0 %v2056
        %2077 = vmatprep.subr.bf16.mxu0 0
        %2078 = vmatpush1.bf16.xpose.msra.mxu0 %v2059
        %2079 = vmatprep.subr.bf16.mxu0 0
        %2080 = vmatpush1.bf16.xpose.msra.mxu0 %v2062
        %2081 = vmatprep.subr.bf16.mxu0 0
        %2082 = vmatpush1.bf16.xpose.msra.mxu0 %v2065
        %2083 = vmatprep.subr.bf16.mxu0 0
        %2084 = vmatpush1.bf16.xpose.msra.mxu0 0
        %2085 = vmatprep.subr.bf16.mxu0 0
        %2086 = vmatpush1.bf16.xpose.msra.mxu0 0
        %2087 = vmatprep.subr.bf16.mxu0 0
        %2088 = vmatpush1.bf16.xpose.msra.mxu0 0
        %2089 = vmatprep.subr.bf16.mxu0 0
        %2090 = vmatpush1.bf16.xpose.msra.mxu0 0
        %2091 = vmatprep.subr.bf16.mxu0 0
        %2092 = vmatpush1.bf16.xpose.msra.mxu0 0
        %2093 = vmatprep.subr.bf16.mxu0 0
        %2094 = vmatpush1.bf16.xpose.msra.mxu0 0
        %2095 = vmatprep.subr.bf16.mxu0 0
        %2096 = vmatpush1.bf16.xpose.msra.mxu0 0
        %2097 = vmatprep.subr.bf16.mxu0 0
        %2098 = vmatpush1.bf16.xpose.msra.mxu0 0
        %2099 = vmatprep.mubr.bf16.mxu0 0
        %2100 = vmatmul.mubr.bf16.gmra.mrb[0].mxu0 %v2032
        %v2101 = vpop.f32.mrb[0].mxu0
        %v2102 = vadd.f32 %v1974, %v2101
        %v2103 = vpop.f32.mrb[0].mxu0
        %v2104 = vpop.f32.mrb[0].mxu0
        %v2105 = vadd.f32 %v1979, %v2104
        %v2106 = vpop.f32.mrb[0].mxu0
        %2107 = vmatprep.mubr.bf16.mxu0 0
        %2108 = vmatmul.mubr.bf16.gmra.mrb[0].mxu0 %v2035
        %v2109 = vpop.f32.mrb[0].mxu0
        %v2110 = vadd.f32 %v1984, %v2109
        %v2111 = vpop.f32.mrb[0].mxu0
        %v2112 = vpop.f32.mrb[0].mxu0
        %v2113 = vadd.f32 %v1989, %v2112
        %v2114 = vpop.f32.mrb[0].mxu0
        %2115 = vmatprep.mubr.bf16.mxu0 0
        %2116 = vmatmul.mubr.bf16.gmra.mrb[0].mxu0 %v2038
        %v2117 = vpop.f32.mrb[0].mxu0
        %v2118 = vadd.f32 %v1994, %v2117
        %v2119 = vpop.f32.mrb[0].mxu0
        %v2120 = vpop.f32.mrb[0].mxu0
        %v2121 = vadd.f32 %v1999, %v2120
        %v2122 = vpop.f32.mrb[0].mxu0
        %2123 = vmatprep.mubr.bf16.mxu0 0
        %2124 = vmatmul.mubr.bf16.gmra.mrb[0].mxu0 %v2041
        %v2125 = vpop.f32.mrb[0].mxu0
        %v2126 = vadd.f32 %v2004, %v2125
        %v2127 = vpop.f32.mrb[0].mxu0
        %v2128 = vpop.f32.mrb[0].mxu0
        %v2129 = vadd.f32 %v2009, %v2128
        %v2130 = vpop.f32.mrb[0].mxu0
        %2131 = vdwg.mxu0
        %v2132 = vld [vmem:[%s335] sm:$0xff]
        %v2133 = vld [vmem:[%s335 + $0x8] sm:$0xff]
        %v2134 = vld [vmem:[%s335 + $0x10] sm:$0xff]
        %v2135 = vld [vmem:[%s335 + $0x18] sm:$0xff]
        %v2136 = vld [vmem:[%s335 + $0x20] sm:$0xff]
        %v2137 = vld [vmem:[%s335 + $0x28] sm:$0xff]
        %v2138 = vld [vmem:[%s335 + $0x30] sm:$0xff]
        %v2139 = vld [vmem:[%s335 + $0x38] sm:$0xff]
        %v2140 = vadd.f32 %v2132, %v2102
        %v2141 = vadd.f32 %v2133, %v2105
        %v2142 = vadd.f32 %v2134, %v2110
        %v2143 = vadd.f32 %v2135, %v2113
        %v2144 = vadd.f32 %v2136, %v2118
        %v2145 = vadd.f32 %v2137, %v2121
        %v2146 = vadd.f32 %v2138, %v2126
        %v2147 = vadd.f32 %v2139, %v2129
        %2148 = vst [vmem:[%s367] sm:$0xff] %v2140
        %2149 = vst [vmem:[%s367 + $0x8] sm:$0xff] %v2141
        %2150 = vst [vmem:[%s367 + $0x10] sm:$0xff] %v2142
        %2151 = vst [vmem:[%s367 + $0x18] sm:$0xff] %v2143
        %2152 = vst [vmem:[%s367 + $0x20] sm:$0xff] %v2144
        %2153 = vst [vmem:[%s367 + $0x28] sm:$0xff] %v2145
        %2154 = vst [vmem:[%s367 + $0x30] sm:$0xff] %v2146
        %2155 = vst [vmem:[%s367 + $0x38] sm:$0xff] %v2147
        %s2156 = sand.u32 %s199, 1
        %s2157 = sand.u32 %s199, 1
        %s2158 = smul.addr %s2157, 64
        %s2159 = scalar_lea.vmem [#allocation7], %s2158
        // Predicated region
        $region91: #{attn_block_pallas.1} parent=81 // pred_check
          %p2160 = pneg %p209
        $region92: #{attn_block_pallas.1} parent=81 // pred_check_branch
          %2162 = sbr.rel (%p2160) target = $region94
        $region93: #{attn_block_pallas.1} parent=81 // pred_region
          %s2163 = smul.addr %s22, 16
          %s2164 = sadd.s32 %s23, %s2163
          %s2165 = smul.addr %s2164, 8
          %s2166 = scalar_lea.vmem %s7, %s2165
          // Predicated region
          $region95: #{attn_block_pallas.1} parent=93 // pred_check
            _
          $region96: #{attn_block_pallas.1} parent=93 // pred_check_branch
            %2168 = sbr.rel (0) target = $region98
          $region97: #{attn_block_pallas.1} parent=93 // pred_region
            // Predicated region
            $region99: #{attn_block_pallas.1} parent=97 // pred_check
              _
            $region100: #{attn_block_pallas.1} parent=97 // pred_check_branch
              %2170 = sbr.rel (0) target = $region102
            $region101: #{attn_block_pallas.1} parent=97 // pred_region
              // Predicated region
              $region114: #{attn_block_pallas.1} parent=101 // pred_check
                _
              $region115: #{attn_block_pallas.1} parent=101 // pred_check_branch
                %2199 = sbr.rel (0) target = $region117
              $region116: #{attn_block_pallas.1} parent=101 // pred_region
                loop: start=0, step=1, limit=1
                $region118: #{attn_block_pallas.1} parent=116 // loop_pre_header
                  _
                $region119: #{attn_block_pallas.1} parent=116 // loop_header
                  %s2201 = sphi 0, %s2205
                  %p2202 = scmp.ge.s32.totalorder %s2201, 1
                  %s2206 = sphi %s2159, %s2159
                  %s2207 = sphi %s2166, %s2166
                $region120: #{attn_block_pallas.1} parent=116 // loop_header_branch
                  %2204 = sbr.rel (%p2202) target = $region124
                $region121: #{attn_block_pallas.1} parent=116 // loop_body
                  %v2208 = vld [vmem:[%s2206] sm:$0xff]
                  %2209 = vst [vmem:[%s2207] sm:$0xff] %v2208
                  %v2210 = vld [vmem:[%s2206 + $0x8] sm:$0xff]
                  %2211 = vst [vmem:[%s2207 + $0x10] sm:$0xff] %v2210
                  %v2212 = vld [vmem:[%s2206 + $0x10] sm:$0xff]
                  %2213 = vst [vmem:[%s2207 + $0x20] sm:$0xff] %v2212
                  %v2214 = vld [vmem:[%s2206 + $0x18] sm:$0xff]
                  %2215 = vst [vmem:[%s2207 + $0x30] sm:$0xff] %v2214
                  %v2216 = vld [vmem:[%s2206 + $0x20] sm:$0xff]
                  %2217 = vst [vmem:[%s2207 + $0x40] sm:$0xff] %v2216
                  %v2218 = vld [vmem:[%s2206 + $0x28] sm:$0xff]
                  %2219 = vst [vmem:[%s2207 + $0x50] sm:$0xff] %v2218
                  %v2220 = vld [vmem:[%s2206 + $0x30] sm:$0xff]
                  %2221 = vst [vmem:[%s2207 + $0x60] sm:$0xff] %v2220
                  %v2222 = vld [vmem:[%s2206 + $0x38] sm:$0xff]
                  %2223 = vst [vmem:[%s2207 + $0x70] sm:$0xff] %v2222
                $region122: #{attn_block_pallas.1} parent=116 // loop_footer
                  %s2205 = sadd.s32 1, %s2201
                $region123: #{attn_block_pallas.1} parent=116 // loop_footer_branch
                  %2200 = sbr.rel target = $region119
                $region124: #{attn_block_pallas.1} parent=116 // loop_exit
                  _
              $region117: #{attn_block_pallas.1} parent=101 // pred_fallthru
                _
              // Predicated region
              $region125: #{attn_block_pallas.1} parent=101 // pred_check
                _
              $region126: #{attn_block_pallas.1} parent=101 // pred_check_branch
                %2225 = sbr.rel target = $region128
              $region127: #{attn_block_pallas.1} parent=101 // pred_region
                _
              $region128: #{attn_block_pallas.1} parent=101 // pred_fallthru
                _
            $region102: #{attn_block_pallas.1} parent=97 // pred_fallthru
              _
            // Predicated region
            $region103: #{attn_block_pallas.1} parent=97 // pred_check
              _
            $region104: #{attn_block_pallas.1} parent=97 // pred_check_branch
              %2172 = sbr.rel target = $region106
            $region105: #{attn_block_pallas.1} parent=97 // pred_region
              loop: start=0, step=1, limit=1
              $region107: #{attn_block_pallas.1} parent=105 // loop_pre_header
                _
              $region108: #{attn_block_pallas.1} parent=105 // loop_header
                %s2175 = sphi 0, %s2179
                %p2176 = scmp.ge.s32.totalorder %s2175, 1
                %s2180 = sphi %s2159, %s2159
                %s2181 = sphi %s2166, %s2166
              $region109: #{attn_block_pallas.1} parent=105 // loop_header_branch
                %2178 = sbr.rel (%p2176) target = $region113
              $region110: #{attn_block_pallas.1} parent=105 // loop_body
                %v2182 = vld [vmem:[%s2180] sm:$0xff]
                %2183 = vst [vmem:[%s2181] sm:$0xff] %v2182
                %v2184 = vld [vmem:[%s2180 + $0x8] sm:$0xff]
                %2185 = vst [vmem:[%s2181 + $0x10] sm:$0xff] %v2184
                %v2186 = vld [vmem:[%s2180 + $0x10] sm:$0xff]
                %2187 = vst [vmem:[%s2181 + $0x20] sm:$0xff] %v2186
                %v2188 = vld [vmem:[%s2180 + $0x18] sm:$0xff]
                %2189 = vst [vmem:[%s2181 + $0x30] sm:$0xff] %v2188
                %v2190 = vld [vmem:[%s2180 + $0x20] sm:$0xff]
                %2191 = vst [vmem:[%s2181 + $0x40] sm:$0xff] %v2190
                %v2192 = vld [vmem:[%s2180 + $0x28] sm:$0xff]
                %2193 = vst [vmem:[%s2181 + $0x50] sm:$0xff] %v2192
                %v2194 = vld [vmem:[%s2180 + $0x30] sm:$0xff]
                %2195 = vst [vmem:[%s2181 + $0x60] sm:$0xff] %v2194
                %v2196 = vld [vmem:[%s2180 + $0x38] sm:$0xff]
                %2197 = vst [vmem:[%s2181 + $0x70] sm:$0xff] %v2196
              $region111: #{attn_block_pallas.1} parent=105 // loop_footer
                %s2179 = sadd.s32 1, %s2175
              $region112: #{attn_block_pallas.1} parent=105 // loop_footer_branch
                %2174 = sbr.rel target = $region108
              $region113: #{attn_block_pallas.1} parent=105 // loop_exit
                _
            $region106: #{attn_block_pallas.1} parent=97 // pred_fallthru
              _
          $region98: #{attn_block_pallas.1} parent=93 // pred_fallthru
            _
          %2226 = vnop
        $region94: #{attn_block_pallas.1} parent=81 // pred_fallthru
          _
      $region82: #{attn_block_pallas.1} parent=5 // pred_fallthru
        _
      %p2227 = scmp.le.s32.totalorder 2, %s13
      // Predicated region
      $region129: #{attn_block_pallas.1} parent=5 // pred_check
        %p2228 = pneg %p2227
      $region130: #{attn_block_pallas.1} parent=5 // pred_check_branch
        %2230 = sbr.rel (%p2228) target = $region132
      $region131: #{attn_block_pallas.1} parent=5 // pred_region
        %s2231 = ssub.s32 %s13, 2
        // Predicated region
        $region133: #{attn_block_pallas.1} parent=131 // pred_check
          %p2232 = pneg %p215
        $region134: #{attn_block_pallas.1} parent=131 // pred_check_branch
          %2234 = sbr.rel (%p2232) target = $region136
        $region135: #{attn_block_pallas.1} parent=131 // pred_region
          %s2235 = sand.u32 %s200, 1
          %s2236 = sand.u32 %s200, 1
          %s2237 = smul.addr %s2236, 64
          %s2238 = scalar_lea.vmem [#allocation7], %s2237
        $region136: #{attn_block_pallas.1} parent=131 // pred_fallthru
          _
      $region132: #{attn_block_pallas.1} parent=5 // pred_fallthru
        _
    $region6: #{attn_block_pallas.1} parent=1 // loop_footer
      %s17 = sadd.s32 1, %s13
    $region7: #{attn_block_pallas.1} parent=1 // loop_footer_branch
      %12 = sbr.rel target = $region3
    $region8: #{attn_block_pallas.1} parent=1 // loop_exit
      _

</llo_original>
